<compile_context>
chip_gen: v7x
topology: tpu7x:2x2x1
jax: 0.10.0
libtpu: 0.0.40
codegen_flags: <defaults>
</compile_context>

<pallas_src>
import math
from functools import partial

import jax
import jax.numpy as jnp
from jax.experimental import pallas as pl
from jax.experimental.pallas import tpu as pltpu


# -----------------------------------------------------------------------------
# Kernel 1: fused multi-head self-attention block (+ residual + LayerNorm1)
# -----------------------------------------------------------------------------

def _attn_block_kernel(x_ref, mask_ref, wqkv_ref, bqkv_ref, wo_ref, bo_ref,
                       g_ref, beta_ref, o_ref, *, n_heads, scale):
    x = x_ref[0]                                   # (T, D) f32, this batch elem
    T, D = x.shape
    Dh = D // n_heads

    # Fused Q/K/V projection: one MXU pass (bf16 operands, f32 accumulate).
    qkv = jnp.dot(x.astype(jnp.bfloat16), wqkv_ref[...],
                  preferred_element_type=jnp.float32) + bqkv_ref[...]   # (T, 3D)

    # Additive mask bias generated in-kernel from the (T, T) mask tile.
    bias = jnp.where(mask_ref[0] == 0.0, jnp.float32(-1e9), jnp.float32(0.0))

    # Per-head attention, statically unrolled (n_heads is small).
    # Output projection folded into the loop: attn @ Wo == sum_h head_h @ Wo[h].
    proj = jnp.zeros((T, D), jnp.float32)
    for h in range(n_heads):
        q = qkv[:, h * Dh:(h + 1) * Dh].astype(jnp.bfloat16)
        k = qkv[:, D + h * Dh:D + (h + 1) * Dh].astype(jnp.bfloat16)
        v = qkv[:, 2 * D + h * Dh:2 * D + (h + 1) * Dh].astype(jnp.bfloat16)
        # q @ k^T without an explicit transpose (contract feature dims).
        s = jax.lax.dot_general(q, k, (((1,), (1,)), ((), ())),
                                preferred_element_type=jnp.float32)
        s = s * scale + bias
        m = jnp.max(s, axis=-1, keepdims=True)
        p = jnp.exp(s - m)
        p = p * pl.reciprocal(jnp.sum(p, axis=-1, keepdims=True), approx=True)
        head = jnp.dot(p.astype(jnp.bfloat16), v,
                       preferred_element_type=jnp.float32)              # (T, Dh)
        proj = proj + jnp.dot(head.astype(jnp.bfloat16),
                              wo_ref[h * Dh:(h + 1) * Dh, :],
                              preferred_element_type=jnp.float32)

    # Residual + LayerNorm1 (f32, eps=1e-5 to match nn.LayerNorm).
    y = x + proj + bo_ref[...]
    mu = jnp.mean(y, axis=-1, keepdims=True)
    var = jnp.mean((y - mu) * (y - mu), axis=-1, keepdims=True)
    o_ref[0] = (y - mu) * jax.lax.rsqrt(var + 1e-5) * g_ref[...] + beta_ref[...]


def attention_block(x, mask, wqkv, bqkv, wo, bo, gamma, beta, *, n_heads):
    """x: (B, T, D) f32, mask: (B, T, T) f32 (1=keep, 0=mask) -> (B, T, D)."""
    B, T, D = x.shape
    Dh = D // n_heads
    scale = 1.0 / math.sqrt(Dh)
    kernel = partial(_attn_block_kernel, n_heads=n_heads, scale=scale)
    return pl.pallas_call(
        kernel,
        grid=(B,),
        in_specs=[
            pl.BlockSpec((1, T, D), lambda b: (b, 0, 0)),       # x (this batch)
            pl.BlockSpec((1, T, T), lambda b: (b, 0, 0)),       # mask (this batch)
            pl.BlockSpec((D, 3 * D), lambda b: (0, 0)),         # fused Wqkv (resident)
            pl.BlockSpec((1, 3 * D), lambda b: (0, 0)),
            pl.BlockSpec((D, D), lambda b: (0, 0)),             # Wo (resident)
            pl.BlockSpec((1, D), lambda b: (0, 0)),
            pl.BlockSpec((1, D), lambda b: (0, 0)),             # LN1 gamma
            pl.BlockSpec((1, D), lambda b: (0, 0)),             # LN1 beta
        ],
        out_specs=pl.BlockSpec((1, T, D), lambda b: (b, 0, 0)),
        out_shape=jax.ShapeDtypeStruct((B, T, D), jnp.float32),
        compiler_params=pltpu.CompilerParams(
            dimension_semantics=("parallel",)),
    )(x, mask, wqkv, bqkv.reshape(1, 3 * D), wo, bo.reshape(1, D),
      gamma.reshape(1, D), beta.reshape(1, D))


# -----------------------------------------------------------------------------
# Kernel 2: fused FFN (+ residual + LayerNorm2)
# -----------------------------------------------------------------------------

def _ffn_block_kernel(x_ref, w1_ref, b1_ref, w2_ref, b2_ref,
                      g_ref, beta_ref, o_ref):
    x = x_ref[...]                                              # (tm, D) f32
    h = jnp.dot(x.astype(jnp.bfloat16), w1_ref[...],
                preferred_element_type=jnp.float32) + b1_ref[...]
    h = jnp.maximum(h, 0.0)
    ff = jnp.dot(h.astype(jnp.bfloat16), w2_ref[...],
                 preferred_element_type=jnp.float32) + b2_ref[...]
    y = x + ff
    mu = jnp.mean(y, axis=-1, keepdims=True)
    var = jnp.mean((y - mu) * (y - mu), axis=-1, keepdims=True)
    o_ref[...] = (y - mu) * jax.lax.rsqrt(var + 1e-5) * g_ref[...] + beta_ref[...]


def ffn_block(x2d, w1, b1, w2, b2, gamma, beta):
    """x2d: (M, D) f32 -> (M, D) f32 (norm2(x + FFN(x)))."""
    M, D = x2d.shape
    F = w1.shape[1]
    # Row tiling: single block at toy sizes; 256-row tiles at realistic sizes.
    block_m = 256 if (M > 512 and M % 256 == 0) else M
    grid = (M // block_m,)
    return pl.pallas_call(
        _ffn_block_kernel,
        grid=grid,
        in_specs=[
            pl.BlockSpec((block_m, D), lambda i: (i, 0)),
            pl.BlockSpec((D, F), lambda i: (0, 0)),             # W1 (resident)
            pl.BlockSpec((1, F), lambda i: (0, 0)),
            pl.BlockSpec((F, D), lambda i: (0, 0)),             # W2 (resident)
            pl.BlockSpec((1, D), lambda i: (0, 0)),
            pl.BlockSpec((1, D), lambda i: (0, 0)),             # LN2 gamma
            pl.BlockSpec((1, D), lambda i: (0, 0)),             # LN2 beta
        ],
        out_specs=pl.BlockSpec((block_m, D), lambda i: (i, 0)),
        out_shape=jax.ShapeDtypeStruct((M, D), jnp.float32),
        compiler_params=pltpu.CompilerParams(
            dimension_semantics=("parallel",)),
    )(x2d, w1, b1.reshape(1, F), w2, b2.reshape(1, D),
      gamma.reshape(1, D), beta.reshape(1, D))


# -----------------------------------------------------------------------------
# Module glue (matches TransformerEncoderLayer.forward, dropout = identity)
# -----------------------------------------------------------------------------

def transformer_encoder_layer(params, x, mask=None, *, n_heads):
    B, T, D = x.shape
    if mask is None:
        mask = jnp.ones((B, T, T), jnp.float32)
    else:
        mask = mask.astype(jnp.float32)

    # x = norm1(x + self_attention(x, x, x, mask))   (fused, one pallas_call)
    x = attention_block(
        x, mask,
        params["wqkv"], params["bqkv"], params["wo"], params["bo"],
        params["ln1_g"], params["ln1_b"], n_heads=n_heads)

    # x = norm2(x + feed_forward(x))                 (fused, one pallas_call)
    x2d = ffn_block(
        x.reshape(B * T, D),
        params["w1"], params["b1"], params["w2"], params["b2"],
        params["ln2_g"], params["ln2_b"])
    return x2d.reshape(B, T, D)


# -----------------------------------------------------------------------------
# Deterministic parameter init (PyTorch nn.Linear-style uniform ±1/sqrt(fan_in))
# -----------------------------------------------------------------------------

def _init_linear(key, fan_in, fan_out):
    kw, kb = jax.random.split(key)
    bound = 1.0 / math.sqrt(fan_in)
    w = jax.random.uniform(kw, (fan_in, fan_out), jnp.float32, -bound, bound)
    b = jax.random.uniform(kb, (fan_out,), jnp.float32, -bound, bound)
    return w, b


def init_params(key, d_model, dim_feedforward):
    keys = jax.random.split(key, 6)
    wq, bq = _init_linear(keys[0], d_model, d_model)
    wk, bk = _init_linear(keys[1], d_model, d_model)
    wv, bv = _init_linear(keys[2], d_model, d_model)
    wo, bo = _init_linear(keys[3], d_model, d_model)
    w1, b1 = _init_linear(keys[4], d_model, dim_feedforward)
    w2, b2 = _init_linear(keys[5], dim_feedforward, d_model)

    # Fuse Q/K/V weights into one (D, 3D) matmul; store matmul weights in bf16
    # (f32 accumulation in-kernel), keep biases / LayerNorm params in f32.
    wqkv = jnp.concatenate([wq, wk, wv], axis=1).astype(jnp.bfloat16)
    bqkv = jnp.concatenate([bq, bk, bv], axis=0)

    return dict(
        wqkv=wqkv, bqkv=bqkv,
        wo=wo.astype(jnp.bfloat16), bo=bo,
        w1=w1.astype(jnp.bfloat16), b1=b1,
        w2=w2.astype(jnp.bfloat16), b2=b2,
        ln1_g=jnp.ones((d_model,), jnp.float32),
        ln1_b=jnp.zeros((d_model,), jnp.float32),
        ln2_g=jnp.ones((d_model,), jnp.float32),
        ln2_b=jnp.zeros((d_model,), jnp.float32),
    )


# -----------------------------------------------------------------------------
# Main
# -----------------------------------------------------------------------------

if __name__ == "__main__":
    B, T, D_MODEL, N_HEADS, D_FF = 2, 8, 32, 4, 64

    key = jax.random.PRNGKey(0)
    kx, kp = jax.random.split(key)

    x = jax.random.normal(kx, (B, T, D_MODEL), jnp.float32)

    # Padding-style attention mask [B, T, T]: sequence 0 full length, seq 1 len 5.
    lengths = jnp.array([T, 5], jnp.int32)
    key_mask = (jnp.arange(T)[None, :] < lengths[:, None]).astype(jnp.float32)
    mask = jnp.broadcast_to(key_mask[:, None, :], (B, T, T))

    params = init_params(kp, D_MODEL, D_FF)

    # TODO(synk): dropout layers are identity here (eval-mode semantics).
    out = transformer_encoder_layer(params, x, mask, n_heads=N_HEADS)
    out = jax.block_until_ready(out)
    assert out.shape == (B, T, D_MODEL)
    assert bool(jnp.all(jnp.isfinite(out)))
    print("KERNEL_OK")
</pallas_src>

<mosaic_0001>
module attributes {stable_mosaic.version = 11 : i64} {
  func.func @_attn_block_kernel(%arg0: i32, %arg1: memref<1x8x32xf32, #tpu.memory_space<vmem>>, %arg2: memref<1x8x8xf32, #tpu.memory_space<vmem>>, %arg3: memref<32x96xbf16, #tpu.memory_space<vmem>>, %arg4: memref<1x96xf32, #tpu.memory_space<vmem>>, %arg5: memref<32x32xbf16, #tpu.memory_space<vmem>>, %arg6: memref<1x32xf32, #tpu.memory_space<vmem>>, %arg7: memref<1x32xf32, #tpu.memory_space<vmem>>, %arg8: memref<1x32xf32, #tpu.memory_space<vmem>>, %arg9: memref<1x8x32xf32, #tpu.memory_space<vmem>>) attributes {dimension_semantics = [#tpu.dimension_semantics<parallel>], iteration_bounds = array<i64: 2>, scalar_prefetch = 0 : i64, scratch_operands = 0 : i64, tpu.core_type = #tpu.core_type<tc>, window_params = [{transform_indices = @transform_0, window_bounds = array<i64: 1, 8, 32>}, {transform_indices = @transform_1, window_bounds = array<i64: 1, 8, 8>}, {pipeline_mode = #tpu.pipeline_mode<synchronous>, transform_indices = @transform_2, window_bounds = array<i64: 32, 96>}, {pipeline_mode = #tpu.pipeline_mode<synchronous>, transform_indices = @transform_3, window_bounds = array<i64: 1, 96>}, {pipeline_mode = #tpu.pipeline_mode<synchronous>, transform_indices = @transform_4, window_bounds = array<i64: 32, 32>}, {pipeline_mode = #tpu.pipeline_mode<synchronous>, transform_indices = @transform_5, window_bounds = array<i64: 1, 32>}, {pipeline_mode = #tpu.pipeline_mode<synchronous>, transform_indices = @transform_6, window_bounds = array<i64: 1, 32>}, {pipeline_mode = #tpu.pipeline_mode<synchronous>, transform_indices = @transform_7, window_bounds = array<i64: 1, 32>}, {transform_indices = @transform_8, window_bounds = array<i64: 1, 8, 32>}]} {
    %c0 = arith.constant 0 : index
    %c0_0 = arith.constant 0 : index
    %c0_1 = arith.constant 0 : index
    %0 = vector.load %arg1[%c0, %c0_0, %c0_1] : memref<1x8x32xf32, #tpu.memory_space<vmem>>, vector<1x8x32xf32>
    %1 = vector.shape_cast %0 : vector<1x8x32xf32> to vector<8x32xf32>
    %2 = arith.truncf %1 : vector<8x32xf32> to vector<8x32xbf16>
    %c0_2 = arith.constant 0 : index
    %c0_3 = arith.constant 0 : index
    %3 = vector.load %arg3[%c0_2, %c0_3] : memref<32x96xbf16, #tpu.memory_space<vmem>>, vector<32x96xbf16>
    %cst = arith.constant dense<0.000000e+00> : vector<8x96xf32>
    %4 = tpu.matmul %2, %3, %cst {dimension_numbers = #tpu.dot_dimension_numbers<[1], [0], [0], [1], [0, 0, 1, 1], [], []>} : vector<8x32xbf16>, vector<32x96xbf16>, vector<8x96xf32> -> vector<8x96xf32>
    %c0_4 = arith.constant 0 : index
    %c0_5 = arith.constant 0 : index
    %5 = vector.load %arg4[%c0_4, %c0_5] : memref<1x96xf32, #tpu.memory_space<vmem>>, vector<1x96xf32>
    %6 = vector.broadcast %5 : vector<1x96xf32> to vector<8x96xf32>
    %7 = arith.addf %4, %6 : vector<8x96xf32>
    %c0_6 = arith.constant 0 : index
    %c0_7 = arith.constant 0 : index
    %c0_8 = arith.constant 0 : index
    %8 = vector.load %arg2[%c0_6, %c0_7, %c0_8] : memref<1x8x8xf32, #tpu.memory_space<vmem>>, vector<1x8x8xf32>
    %9 = vector.shape_cast %8 : vector<1x8x8xf32> to vector<8x8xf32>
    %cst_9 = arith.constant 0.000000e+00 : f32
    %10 = vector.broadcast %cst_9 : f32 to vector<8x8xf32>
    %11 = arith.cmpf oeq, %9, %10 : vector<8x8xf32>
    %cst_10 = arith.constant -1.000000e+09 : f32
    %cst_11 = arith.constant 0.000000e+00 : f32
    %12 = vector.broadcast %cst_10 : f32 to vector<8x8xf32>
    %13 = vector.broadcast %cst_11 : f32 to vector<8x8xf32>
    %14 = arith.select %11, %12, %13 : vector<8x8xi1>, vector<8x8xf32>
    %cst_12 = arith.constant 0.000000e+00 : f32
    %15 = vector.broadcast %cst_12 : f32 to vector<8x32xf32>
    %16 = vector.extract_strided_slice %7 {offsets = [0, 0], sizes = [8, 8], strides = [1, 1]} : vector<8x96xf32> to vector<8x8xf32>
    %17 = arith.truncf %16 : vector<8x8xf32> to vector<8x8xbf16>
    %18 = vector.extract_strided_slice %7 {offsets = [0, 32], sizes = [8, 8], strides = [1, 1]} : vector<8x96xf32> to vector<8x8xf32>
    %19 = arith.truncf %18 : vector<8x8xf32> to vector<8x8xbf16>
    %20 = vector.extract_strided_slice %7 {offsets = [0, 64], sizes = [8, 8], strides = [1, 1]} : vector<8x96xf32> to vector<8x8xf32>
    %21 = arith.truncf %20 : vector<8x8xf32> to vector<8x8xbf16>
    %cst_13 = arith.constant dense<0.000000e+00> : vector<8x8xf32>
    %22 = tpu.matmul %17, %19, %cst_13 {dimension_numbers = #tpu.dot_dimension_numbers<[1], [1], [0], [0], [0, 0, 1, 0], [], []>} : vector<8x8xbf16>, vector<8x8xbf16>, vector<8x8xf32> -> vector<8x8xf32>
    %cst_14 = arith.constant 0.353553385 : f32
    %23 = vector.broadcast %cst_14 : f32 to vector<8x8xf32>
    %24 = arith.mulf %22, %23 : vector<8x8xf32>
    %25 = arith.addf %24, %14 : vector<8x8xf32>
    %cst_15 = arith.constant dense<0xFF800000> : vector<8xf32>
    %26 = vector.multi_reduction <maximumf>, %25, %cst_15 [1] : vector<8x8xf32> to vector<8xf32>
    %27 = vector.shape_cast %26 : vector<8xf32> to vector<8x1xf32>
    %28 = vector.broadcast %27 : vector<8x1xf32> to vector<8x8xf32>
    %29 = arith.subf %25, %28 : vector<8x8xf32>
    %30 = math.exp %29 : vector<8x8xf32>
    %cst_16 = arith.constant dense<0.000000e+00> : vector<8xf32>
    %31 = vector.multi_reduction <add>, %30, %cst_16 [1] : vector<8x8xf32> to vector<8xf32>
    %32 = vector.shape_cast %31 : vector<8xf32> to vector<8x1xf32>
    %33 = tpu.reciprocal %32 {approx = true} : vector<8x1xf32> -> vector<8x1xf32>
    %34 = vector.broadcast %33 : vector<8x1xf32> to vector<8x8xf32>
    %35 = arith.mulf %30, %34 : vector<8x8xf32>
    %36 = arith.truncf %35 : vector<8x8xf32> to vector<8x8xbf16>
    %cst_17 = arith.constant dense<0.000000e+00> : vector<8x8xf32>
    %37 = tpu.matmul %36, %21, %cst_17 {dimension_numbers = #tpu.dot_dimension_numbers<[1], [0], [0], [1], [0, 0, 1, 1], [], []>} : vector<8x8xbf16>, vector<8x8xbf16>, vector<8x8xf32> -> vector<8x8xf32>
    %38 = arith.truncf %37 : vector<8x8xf32> to vector<8x8xbf16>
    %c0_18 = arith.constant 0 : index
    %c0_19 = arith.constant 0 : index
    %39 = vector.load %arg5[%c0_18, %c0_19] : memref<32x32xbf16, #tpu.memory_space<vmem>>, vector<8x32xbf16>
    %cst_20 = arith.constant dense<0.000000e+00> : vector<8x32xf32>
    %40 = tpu.matmul %38, %39, %cst_20 {dimension_numbers = #tpu.dot_dimension_numbers<[1], [0], [0], [1], [0, 0, 1, 1], [], []>} : vector<8x8xbf16>, vector<8x32xbf16>, vector<8x32xf32> -> vector<8x32xf32>
    %41 = arith.addf %15, %40 : vector<8x32xf32>
    %42 = vector.extract_strided_slice %7 {offsets = [0, 8], sizes = [8, 8], strides = [1, 1]} : vector<8x96xf32> to vector<8x8xf32>
    %43 = arith.truncf %42 : vector<8x8xf32> to vector<8x8xbf16>
    %44 = vector.extract_strided_slice %7 {offsets = [0, 40], sizes = [8, 8], strides = [1, 1]} : vector<8x96xf32> to vector<8x8xf32>
    %45 = arith.truncf %44 : vector<8x8xf32> to vector<8x8xbf16>
    %46 = vector.extract_strided_slice %7 {offsets = [0, 72], sizes = [8, 8], strides = [1, 1]} : vector<8x96xf32> to vector<8x8xf32>
    %47 = arith.truncf %46 : vector<8x8xf32> to vector<8x8xbf16>
    %cst_21 = arith.constant dense<0.000000e+00> : vector<8x8xf32>
    %48 = tpu.matmul %43, %45, %cst_21 {dimension_numbers = #tpu.dot_dimension_numbers<[1], [1], [0], [0], [0, 0, 1, 0], [], []>} : vector<8x8xbf16>, vector<8x8xbf16>, vector<8x8xf32> -> vector<8x8xf32>
    %cst_22 = arith.constant 0.353553385 : f32
    %49 = vector.broadcast %cst_22 : f32 to vector<8x8xf32>
    %50 = arith.mulf %48, %49 : vector<8x8xf32>
    %51 = arith.addf %50, %14 : vector<8x8xf32>
    %cst_23 = arith.constant dense<0xFF800000> : vector<8xf32>
    %52 = vector.multi_reduction <maximumf>, %51, %cst_23 [1] : vector<8x8xf32> to vector<8xf32>
    %53 = vector.shape_cast %52 : vector<8xf32> to vector<8x1xf32>
    %54 = vector.broadcast %53 : vector<8x1xf32> to vector<8x8xf32>
    %55 = arith.subf %51, %54 : vector<8x8xf32>
    %56 = math.exp %55 : vector<8x8xf32>
    %cst_24 = arith.constant dense<0.000000e+00> : vector<8xf32>
    %57 = vector.multi_reduction <add>, %56, %cst_24 [1] : vector<8x8xf32> to vector<8xf32>
    %58 = vector.shape_cast %57 : vector<8xf32> to vector<8x1xf32>
    %59 = tpu.reciprocal %58 {approx = true} : vector<8x1xf32> -> vector<8x1xf32>
    %60 = vector.broadcast %59 : vector<8x1xf32> to vector<8x8xf32>
    %61 = arith.mulf %56, %60 : vector<8x8xf32>
    %62 = arith.truncf %61 : vector<8x8xf32> to vector<8x8xbf16>
    %cst_25 = arith.constant dense<0.000000e+00> : vector<8x8xf32>
    %63 = tpu.matmul %62, %47, %cst_25 {dimension_numbers = #tpu.dot_dimension_numbers<[1], [0], [0], [1], [0, 0, 1, 1], [], []>} : vector<8x8xbf16>, vector<8x8xbf16>, vector<8x8xf32> -> vector<8x8xf32>
    %64 = arith.truncf %63 : vector<8x8xf32> to vector<8x8xbf16>
    %c8 = arith.constant 8 : index
    %c0_26 = arith.constant 0 : index
    %65 = vector.load %arg5[%c8, %c0_26] : memref<32x32xbf16, #tpu.memory_space<vmem>>, vector<8x32xbf16>
    %cst_27 = arith.constant dense<0.000000e+00> : vector<8x32xf32>
    %66 = tpu.matmul %64, %65, %cst_27 {dimension_numbers = #tpu.dot_dimension_numbers<[1], [0], [0], [1], [0, 0, 1, 1], [], []>} : vector<8x8xbf16>, vector<8x32xbf16>, vector<8x32xf32> -> vector<8x32xf32>
    %67 = arith.addf %41, %66 : vector<8x32xf32>
    %68 = vector.extract_strided_slice %7 {offsets = [0, 16], sizes = [8, 8], strides = [1, 1]} : vector<8x96xf32> to vector<8x8xf32>
    %69 = arith.truncf %68 : vector<8x8xf32> to vector<8x8xbf16>
    %70 = vector.extract_strided_slice %7 {offsets = [0, 48], sizes = [8, 8], strides = [1, 1]} : vector<8x96xf32> to vector<8x8xf32>
    %71 = arith.truncf %70 : vector<8x8xf32> to vector<8x8xbf16>
    %72 = vector.extract_strided_slice %7 {offsets = [0, 80], sizes = [8, 8], strides = [1, 1]} : vector<8x96xf32> to vector<8x8xf32>
    %73 = arith.truncf %72 : vector<8x8xf32> to vector<8x8xbf16>
    %cst_28 = arith.constant dense<0.000000e+00> : vector<8x8xf32>
    %74 = tpu.matmul %69, %71, %cst_28 {dimension_numbers = #tpu.dot_dimension_numbers<[1], [1], [0], [0], [0, 0, 1, 0], [], []>} : vector<8x8xbf16>, vector<8x8xbf16>, vector<8x8xf32> -> vector<8x8xf32>
    %cst_29 = arith.constant 0.353553385 : f32
    %75 = vector.broadcast %cst_29 : f32 to vector<8x8xf32>
    %76 = arith.mulf %74, %75 : vector<8x8xf32>
    %77 = arith.addf %76, %14 : vector<8x8xf32>
    %cst_30 = arith.constant dense<0xFF800000> : vector<8xf32>
    %78 = vector.multi_reduction <maximumf>, %77, %cst_30 [1] : vector<8x8xf32> to vector<8xf32>
    %79 = vector.shape_cast %78 : vector<8xf32> to vector<8x1xf32>
    %80 = vector.broadcast %79 : vector<8x1xf32> to vector<8x8xf32>
    %81 = arith.subf %77, %80 : vector<8x8xf32>
    %82 = math.exp %81 : vector<8x8xf32>
    %cst_31 = arith.constant dense<0.000000e+00> : vector<8xf32>
    %83 = vector.multi_reduction <add>, %82, %cst_31 [1] : vector<8x8xf32> to vector<8xf32>
    %84 = vector.shape_cast %83 : vector<8xf32> to vector<8x1xf32>
    %85 = tpu.reciprocal %84 {approx = true} : vector<8x1xf32> -> vector<8x1xf32>
    %86 = vector.broadcast %85 : vector<8x1xf32> to vector<8x8xf32>
    %87 = arith.mulf %82, %86 : vector<8x8xf32>
    %88 = arith.truncf %87 : vector<8x8xf32> to vector<8x8xbf16>
    %cst_32 = arith.constant dense<0.000000e+00> : vector<8x8xf32>
    %89 = tpu.matmul %88, %73, %cst_32 {dimension_numbers = #tpu.dot_dimension_numbers<[1], [0], [0], [1], [0, 0, 1, 1], [], []>} : vector<8x8xbf16>, vector<8x8xbf16>, vector<8x8xf32> -> vector<8x8xf32>
    %90 = arith.truncf %89 : vector<8x8xf32> to vector<8x8xbf16>
    %c16 = arith.constant 16 : index
    %c0_33 = arith.constant 0 : index
    %91 = vector.load %arg5[%c16, %c0_33] : memref<32x32xbf16, #tpu.memory_space<vmem>>, vector<8x32xbf16>
    %cst_34 = arith.constant dense<0.000000e+00> : vector<8x32xf32>
    %92 = tpu.matmul %90, %91, %cst_34 {dimension_numbers = #tpu.dot_dimension_numbers<[1], [0], [0], [1], [0, 0, 1, 1], [], []>} : vector<8x8xbf16>, vector<8x32xbf16>, vector<8x32xf32> -> vector<8x32xf32>
    %93 = arith.addf %67, %92 : vector<8x32xf32>
    %94 = vector.extract_strided_slice %7 {offsets = [0, 24], sizes = [8, 8], strides = [1, 1]} : vector<8x96xf32> to vector<8x8xf32>
    %95 = arith.truncf %94 : vector<8x8xf32> to vector<8x8xbf16>
    %96 = vector.extract_strided_slice %7 {offsets = [0, 56], sizes = [8, 8], strides = [1, 1]} : vector<8x96xf32> to vector<8x8xf32>
    %97 = arith.truncf %96 : vector<8x8xf32> to vector<8x8xbf16>
    %98 = vector.extract_strided_slice %7 {offsets = [0, 88], sizes = [8, 8], strides = [1, 1]} : vector<8x96xf32> to vector<8x8xf32>
    %99 = arith.truncf %98 : vector<8x8xf32> to vector<8x8xbf16>
    %cst_35 = arith.constant dense<0.000000e+00> : vector<8x8xf32>
    %100 = tpu.matmul %95, %97, %cst_35 {dimension_numbers = #tpu.dot_dimension_numbers<[1], [1], [0], [0], [0, 0, 1, 0], [], []>} : vector<8x8xbf16>, vector<8x8xbf16>, vector<8x8xf32> -> vector<8x8xf32>
    %cst_36 = arith.constant 0.353553385 : f32
    %101 = vector.broadcast %cst_36 : f32 to vector<8x8xf32>
    %102 = arith.mulf %100, %101 : vector<8x8xf32>
    %103 = arith.addf %102, %14 : vector<8x8xf32>
    %cst_37 = arith.constant dense<0xFF800000> : vector<8xf32>
    %104 = vector.multi_reduction <maximumf>, %103, %cst_37 [1] : vector<8x8xf32> to vector<8xf32>
    %105 = vector.shape_cast %104 : vector<8xf32> to vector<8x1xf32>
    %106 = vector.broadcast %105 : vector<8x1xf32> to vector<8x8xf32>
    %107 = arith.subf %103, %106 : vector<8x8xf32>
    %108 = math.exp %107 : vector<8x8xf32>
    %cst_38 = arith.constant dense<0.000000e+00> : vector<8xf32>
    %109 = vector.multi_reduction <add>, %108, %cst_38 [1] : vector<8x8xf32> to vector<8xf32>
    %110 = vector.shape_cast %109 : vector<8xf32> to vector<8x1xf32>
    %111 = tpu.reciprocal %110 {approx = true} : vector<8x1xf32> -> vector<8x1xf32>
    %112 = vector.broadcast %111 : vector<8x1xf32> to vector<8x8xf32>
    %113 = arith.mulf %108, %112 : vector<8x8xf32>
    %114 = arith.truncf %113 : vector<8x8xf32> to vector<8x8xbf16>
    %cst_39 = arith.constant dense<0.000000e+00> : vector<8x8xf32>
    %115 = tpu.matmul %114, %99, %cst_39 {dimension_numbers = #tpu.dot_dimension_numbers<[1], [0], [0], [1], [0, 0, 1, 1], [], []>} : vector<8x8xbf16>, vector<8x8xbf16>, vector<8x8xf32> -> vector<8x8xf32>
    %116 = arith.truncf %115 : vector<8x8xf32> to vector<8x8xbf16>
    %c24 = arith.constant 24 : index
    %c0_40 = arith.constant 0 : index
    %117 = vector.load %arg5[%c24, %c0_40] : memref<32x32xbf16, #tpu.memory_space<vmem>>, vector<8x32xbf16>
    %cst_41 = arith.constant dense<0.000000e+00> : vector<8x32xf32>
    %118 = tpu.matmul %116, %117, %cst_41 {dimension_numbers = #tpu.dot_dimension_numbers<[1], [0], [0], [1], [0, 0, 1, 1], [], []>} : vector<8x8xbf16>, vector<8x32xbf16>, vector<8x32xf32> -> vector<8x32xf32>
    %119 = arith.addf %93, %118 : vector<8x32xf32>
    %120 = arith.addf %1, %119 : vector<8x32xf32>
    %c0_42 = arith.constant 0 : index
    %c0_43 = arith.constant 0 : index
    %121 = vector.load %arg6[%c0_42, %c0_43] : memref<1x32xf32, #tpu.memory_space<vmem>>, vector<1x32xf32>
    %122 = vector.broadcast %121 : vector<1x32xf32> to vector<8x32xf32>
    %123 = arith.addf %120, %122 : vector<8x32xf32>
    %cst_44 = arith.constant dense<0.000000e+00> : vector<8xf32>
    %124 = vector.multi_reduction <add>, %123, %cst_44 [1] : vector<8x32xf32> to vector<8xf32>
    %125 = vector.shape_cast %124 : vector<8xf32> to vector<8x1xf32>
    %cst_45 = arith.constant 3.200000e+01 : f32
    %126 = vector.broadcast %cst_45 : f32 to vector<8x1xf32>
    %127 = arith.divf %125, %126 : vector<8x1xf32>
    %128 = vector.broadcast %127 : vector<8x1xf32> to vector<8x32xf32>
    %129 = arith.subf %123, %128 : vector<8x32xf32>
    %130 = vector.broadcast %127 : vector<8x1xf32> to vector<8x32xf32>
    %131 = arith.subf %123, %130 : vector<8x32xf32>
    %132 = arith.mulf %129, %131 : vector<8x32xf32>
    %cst_46 = arith.constant dense<0.000000e+00> : vector<8xf32>
    %133 = vector.multi_reduction <add>, %132, %cst_46 [1] : vector<8x32xf32> to vector<8xf32>
    %134 = vector.shape_cast %133 : vector<8xf32> to vector<8x1xf32>
    %cst_47 = arith.constant 3.200000e+01 : f32
    %135 = vector.broadcast %cst_47 : f32 to vector<8x1xf32>
    %136 = arith.divf %134, %135 : vector<8x1xf32>
    %137 = vector.broadcast %127 : vector<8x1xf32> to vector<8x32xf32>
    %138 = arith.subf %123, %137 : vector<8x32xf32>
    %cst_48 = arith.constant 9.99999974E-6 : f32
    %139 = vector.broadcast %cst_48 : f32 to vector<8x1xf32>
    %140 = arith.addf %136, %139 : vector<8x1xf32>
    %141 = math.rsqrt %140 : vector<8x1xf32>
    %142 = vector.broadcast %141 : vector<8x1xf32> to vector<8x32xf32>
    %143 = arith.mulf %138, %142 : vector<8x32xf32>
    %c0_49 = arith.constant 0 : index
    %c0_50 = arith.constant 0 : index
    %144 = vector.load %arg7[%c0_49, %c0_50] : memref<1x32xf32, #tpu.memory_space<vmem>>, vector<1x32xf32>
    %145 = vector.broadcast %144 : vector<1x32xf32> to vector<8x32xf32>
    %146 = arith.mulf %143, %145 : vector<8x32xf32>
    %c0_51 = arith.constant 0 : index
    %c0_52 = arith.constant 0 : index
    %147 = vector.load %arg8[%c0_51, %c0_52] : memref<1x32xf32, #tpu.memory_space<vmem>>, vector<1x32xf32>
    %148 = vector.broadcast %147 : vector<1x32xf32> to vector<8x32xf32>
    %149 = arith.addf %146, %148 : vector<8x32xf32>
    %c0_53 = arith.constant 0 : index
    %c0_54 = arith.constant 0 : index
    %c0_55 = arith.constant 0 : index
    %150 = vector.load %arg9[%c0_53, %c0_54, %c0_55] : memref<1x8x32xf32, #tpu.memory_space<vmem>>, vector<1x8x32xf32>
    %151 = vector.shape_cast %150 : vector<1x8x32xf32> to vector<8x32xf32>
    %152 = vector.shape_cast %149 : vector<8x32xf32> to vector<1x8x32xf32>
    tpu.vector_store %arg9[%c0_53, %c0_54, %c0_55], %152 {strides = array<i32>} : memref<1x8x32xf32, #tpu.memory_space<vmem>>, vector<1x8x32xf32>,
    return
  }
  func.func @transform_0(%arg0: i32) -> (i32, i32, i32) {
    %c0_i32 = arith.constant 0 : i32
    %c0_i32_0 = arith.constant 0 : i32
    %c0_i32_1 = arith.constant 0 : i32
    return %arg0, %c0_i32, %c0_i32_0 : i32, i32, i32
  }
  func.func @transform_1(%arg0: i32) -> (i32, i32, i32) {
    %c0_i32 = arith.constant 0 : i32
    %c0_i32_0 = arith.constant 0 : i32
    %c0_i32_1 = arith.constant 0 : i32
    return %arg0, %c0_i32, %c0_i32_0 : i32, i32, i32
  }
  func.func @transform_2(%arg0: i32) -> (i32, i32) {
    %c0_i32 = arith.constant 0 : i32
    %c0_i32_0 = arith.constant 0 : i32
    %c0_i32_1 = arith.constant 0 : i32
    return %c0_i32, %c0_i32_0 : i32, i32
  }
  func.func @transform_3(%arg0: i32) -> (i32, i32) {
    %c0_i32 = arith.constant 0 : i32
    %c0_i32_0 = arith.constant 0 : i32
    %c0_i32_1 = arith.constant 0 : i32
    return %c0_i32, %c0_i32_0 : i32, i32
  }
  func.func @transform_4(%arg0: i32) -> (i32, i32) {
    %c0_i32 = arith.constant 0 : i32
    %c0_i32_0 = arith.constant 0 : i32
    %c0_i32_1 = arith.constant 0 : i32
    return %c0_i32, %c0_i32_0 : i32, i32
  }
  func.func @transform_5(%arg0: i32) -> (i32, i32) {
    %c0_i32 = arith.constant 0 : i32
    %c0_i32_0 = arith.constant 0 : i32
    %c0_i32_1 = arith.constant 0 : i32
    return %c0_i32, %c0_i32_0 : i32, i32
  }
  func.func @transform_6(%arg0: i32) -> (i32, i32) {
    %c0_i32 = arith.constant 0 : i32
    %c0_i32_0 = arith.constant 0 : i32
    %c0_i32_1 = arith.constant 0 : i32
    return %c0_i32, %c0_i32_0 : i32, i32
  }
  func.func @transform_7(%arg0: i32) -> (i32, i32) {
    %c0_i32 = arith.constant 0 : i32
    %c0_i32_0 = arith.constant 0 : i32
    %c0_i32_1 = arith.constant 0 : i32
    return %c0_i32, %c0_i32_0 : i32, i32
  }
  func.func @transform_8(%arg0: i32) -> (i32, i32, i32) {
    %c0_i32 = arith.constant 0 : i32
    %c0_i32_0 = arith.constant 0 : i32
    %c0_i32_1 = arith.constant 0 : i32
    return %arg0, %c0_i32, %c0_i32_0 : i32, i32, i32
  }
}

</mosaic_0001>

<llo_original>
// kernel: tpu_custom_call.1
$region0: #{tpu_custom_call.1}
  #allocation0 [shape = 'u32[]', space=smem, size = 0x4, offset = 0x4, fixed_abs, tag = 'smem constant byte address 0x4 - core index']
  #allocation1 [shape = 'u32[144,128]{1,0:T(1,128)}', space=vmem, size = 0x12000, scoped, tag = 'internal scratch']
  %s0 = inlined_call_operand.hbm [shape: f32[2,8,32], index: 0, kind: input, shape index: {}]
  %s1 = inlined_call_operand.hbm [shape: f32[2,8,8], index: 1, kind: input, shape index: {}]
  %s2 = inlined_call_operand.hbm [shape: bf16[32,96], index: 2, kind: input, shape index: {}]
  %s3 = inlined_call_operand.vmem [shape: f32[1,96], index: 3, kind: input, shape index: {}]
  %s4 = inlined_call_operand.hbm [shape: bf16[32,32], index: 4, kind: input, shape index: {}]
  %s5 = inlined_call_operand.vmem [shape: f32[1,32], index: 5, kind: input, shape index: {}]
  %s6 = inlined_call_operand.vmem [shape: f32[1,32], index: 6, kind: input, shape index: {}]
  %s7 = inlined_call_operand.vmem [shape: f32[1,32], index: 7, kind: input, shape index: {}]
  %s8 = inlined_call_operand.hbm [shape: f32[2,8,32], index: 8, kind: output, shape index: {}]
  %s9 = sld [smem:[#allocation0]]
  $region81: #{tpu_custom_call.1} parent=0
    _
  %s11 = ssub.s32 1, %s9
  %s12 = scalar_select 0, %s11, %s9
  $region1: #{tpu_custom_call.1} parent=0
    #allocation2 [shape = 'u8[8192]{0}', space=vmem, size = 0x2000, scoped, tag = 'input window, operand 0']
    #allocation3 [shape = 's32[2]{0}', space=sflag, size = 0x8, scoped, tag = 'scoped memory for tpu_custom_call.1']
    #allocation4 [shape = 's32[2]{0}', space=sflag, size = 0x8, scoped, tag = 'scoped memory for tpu_custom_call.1']
    #allocation5 [shape = 'u8[8192]{0}', space=vmem, size = 0x2000, scoped, tag = 'input window, operand 1']
    #allocation6 [shape = 's32[2]{0}', space=sflag, size = 0x8, scoped, tag = 'scoped memory for tpu_custom_call.1']
    #allocation7 [shape = 'u8[8192]{0}', space=vmem, size = 0x2000, scoped, tag = 'input window, operand 2, single buffered']
    #allocation8 [shape = 'u8[8192]{0}', space=vmem, size = 0x2000, scoped, tag = 'input window, operand 4, single buffered']
    #allocation9 [shape = 's32[1]{0}', space=sflag, size = 0x4, scoped, tag = 'scoped memory for tpu_custom_call.1']
    #allocation10 [shape = 'u8[8192]{0}', space=vmem, size = 0x2000, scoped, tag = 'output window, operand 0']
    %13 = vsyncpa [#allocation3], 0
    %s14 = scalar_lea.sflag [#allocation3], 1
    %15 = vsyncpa %s14, 0
    %16 = vsyncpa [#allocation6], 0
    %s17 = scalar_lea.sflag [#allocation6], 1
    %18 = vsyncpa %s17, 0
    %19 = vsyncpa [#allocation9], 0
    %20 = vsyncpa [#allocation4], 0
    %s21 = scalar_lea.sflag [#allocation4], 1
    %22 = vsyncpa %s21, 0
    loop: start=0, step=1, limit=4
    $region2: #{tpu_custom_call.1} parent=1 // loop_pre_header
      _
    $region3: #{tpu_custom_call.1} parent=1 // loop_header
      %s24 = sphi 0, %s28
      %p25 = scmp.ge.s32.totalorder %s24, 4
      %s34 = sphi 0, %s36
      %s37 = sphi 0, %s34
      %s38 = sphi 0, %s37
      %s54 = sphi 0, %s38
      %s60 = sphi 0, %s62
      %s63 = sphi 0, %s60
      %s64 = sphi 0, %s63
      %s80 = sphi 0, %s64
      %s84 = sphi 0, %s84
      %s86 = sphi 0, %s84
      %s87 = sphi 0, %s86
      %s101 = sphi 0, %s87
      %s105 = sphi 0, %s105
      %s107 = sphi 0, %s105
      %s108 = sphi 0, %s107
      %s122 = sphi 0, %s108
      %s126 = sphi 0, %s126
      %s128 = sphi 0, %s126
      %s129 = sphi 0, %s128
      %s143 = sphi 0, %s129
      %s147 = sphi 0, %s147
      %s149 = sphi 0, %s147
      %s150 = sphi 0, %s149
      %s164 = sphi 0, %s150
      %s168 = sphi 0, %s168
      %s170 = sphi 0, %s168
      %s171 = sphi 0, %s170
      %s185 = sphi 0, %s171
      %s189 = sphi 0, %s189
      %s191 = sphi 0, %s189
      %s192 = sphi 0, %s191
      %s206 = sphi 0, %s192
      %s212 = sphi 0, %s214
      %s215 = sphi 0, %s212
      %s216 = sphi 0, %s215
      %s232 = sphi 0, %s216
    $region4: #{tpu_custom_call.1} parent=1 // loop_header_branch
      %27 = sbr.rel (%p25) target = $region8
    $region5: #{tpu_custom_call.1} parent=1 // loop_body
      %s29 = ssub.s32 %s24, 1
      %s30 = ssub.s32 %s24, 2
      %s31 = sadd.s32 %s24, 1
      %s32 = ssub.s32 %s24, %s31
      %p33 = scmp.eq.s32.totalorder %s32, 0
      %s35 = sadd.s32 %s34, 1
      %s36 = scalar_select %p33, %s34, %s35
      %p39 = pneg %p33
      %p40 = scmp.eq.s32.totalorder %s24, 1
      %p41 = por %p39, %p40
      %p42 = scmp.ne.s32.totalorder %s34, %s37
      %p43 = scmp.eq.s32.totalorder %s24, 0
      %p44 = por %p42, %p43
      %p45 = scmp.ne.s32.totalorder %s34, %s37
      %p46 = scmp.eq.s32.totalorder %s29, 1
      %p47 = por %p45, %p46
      %p48 = scmp.ne.s32.totalorder %s37, %s38
      %p49 = scmp.eq.s32.totalorder %s29, 0
      %p50 = por %p48, %p49
      %p51 = scmp.ne.s32.totalorder %s37, %s38
      %p52 = scmp.eq.s32.totalorder %s30, 1
      %p53 = por %p51, %p52
      %p55 = scmp.ne.s32.totalorder %s38, %s54
      %p56 = scmp.eq.s32.totalorder %s30, 0
      %p57 = por %p55, %p56
      %s58 = ssub.s32 %s24, %s31
      %p59 = scmp.eq.s32.totalorder %s58, 0
      %s61 = sadd.s32 %s60, 1
      %s62 = scalar_select %p59, %s60, %s61
      %p65 = pneg %p59
      %p66 = scmp.eq.s32.totalorder %s24, 1
      %p67 = por %p65, %p66
      %p68 = scmp.ne.s32.totalorder %s60, %s63
      %p69 = scmp.eq.s32.totalorder %s24, 0
      %p70 = por %p68, %p69
      %p71 = scmp.ne.s32.totalorder %s60, %s63
      %p72 = scmp.eq.s32.totalorder %s29, 1
      %p73 = por %p71, %p72
      %p74 = scmp.ne.s32.totalorder %s63, %s64
      %p75 = scmp.eq.s32.totalorder %s29, 0
      %p76 = por %p74, %p75
      %p77 = scmp.ne.s32.totalorder %s63, %s64
      %p78 = scmp.eq.s32.totalorder %s30, 1
      %p79 = por %p77, %p78
      %p81 = scmp.ne.s32.totalorder %s64, %s80
      %p82 = scmp.eq.s32.totalorder %s30, 0
      %p83 = por %p81, %p82
      %s85 = sadd.s32 %s84, 1
      %p88 = scmp.eq.s32.totalorder %s24, 1
      %p89 = scmp.ne.s32.totalorder %s84, %s86
      %p90 = scmp.eq.s32.totalorder %s24, 0
      %p91 = por %p89, %p90
      %p92 = scmp.ne.s32.totalorder %s84, %s86
      %p93 = scmp.eq.s32.totalorder %s29, 1
      %p94 = por %p92, %p93
      %p95 = scmp.ne.s32.totalorder %s86, %s87
      %p96 = scmp.eq.s32.totalorder %s29, 0
      %p97 = por %p95, %p96
      %p98 = scmp.ne.s32.totalorder %s86, %s87
      %p99 = scmp.eq.s32.totalorder %s30, 1
      %p100 = por %p98, %p99
      %p102 = scmp.ne.s32.totalorder %s87, %s101
      %p103 = scmp.eq.s32.totalorder %s30, 0
      %p104 = por %p102, %p103
      %s106 = sadd.s32 %s105, 1
      %p109 = scmp.eq.s32.totalorder %s24, 1
      %p110 = scmp.ne.s32.totalorder %s105, %s107
      %p111 = scmp.eq.s32.totalorder %s24, 0
      %p112 = por %p110, %p111
      %p113 = scmp.ne.s32.totalorder %s105, %s107
      %p114 = scmp.eq.s32.totalorder %s29, 1
      %p115 = por %p113, %p114
      %p116 = scmp.ne.s32.totalorder %s107, %s108
      %p117 = scmp.eq.s32.totalorder %s29, 0
      %p118 = por %p116, %p117
      %p119 = scmp.ne.s32.totalorder %s107, %s108
      %p120 = scmp.eq.s32.totalorder %s30, 1
      %p121 = por %p119, %p120
      %p123 = scmp.ne.s32.totalorder %s108, %s122
      %p124 = scmp.eq.s32.totalorder %s30, 0
      %p125 = por %p123, %p124
      %s127 = sadd.s32 %s126, 1
      %p130 = scmp.eq.s32.totalorder %s24, 1
      %p131 = scmp.ne.s32.totalorder %s126, %s128
      %p132 = scmp.eq.s32.totalorder %s24, 0
      %p133 = por %p131, %p132
      %p134 = scmp.ne.s32.totalorder %s126, %s128
      %p135 = scmp.eq.s32.totalorder %s29, 1
      %p136 = por %p134, %p135
      %p137 = scmp.ne.s32.totalorder %s128, %s129
      %p138 = scmp.eq.s32.totalorder %s29, 0
      %p139 = por %p137, %p138
      %p140 = scmp.ne.s32.totalorder %s128, %s129
      %p141 = scmp.eq.s32.totalorder %s30, 1
      %p142 = por %p140, %p141
      %p144 = scmp.ne.s32.totalorder %s129, %s143
      %p145 = scmp.eq.s32.totalorder %s30, 0
      %p146 = por %p144, %p145
      %s148 = sadd.s32 %s147, 1
      %p151 = scmp.eq.s32.totalorder %s24, 1
      %p152 = scmp.ne.s32.totalorder %s147, %s149
      %p153 = scmp.eq.s32.totalorder %s24, 0
      %p154 = por %p152, %p153
      %p155 = scmp.ne.s32.totalorder %s147, %s149
      %p156 = scmp.eq.s32.totalorder %s29, 1
      %p157 = por %p155, %p156
      %p158 = scmp.ne.s32.totalorder %s149, %s150
      %p159 = scmp.eq.s32.totalorder %s29, 0
      %p160 = por %p158, %p159
      %p161 = scmp.ne.s32.totalorder %s149, %s150
      %p162 = scmp.eq.s32.totalorder %s30, 1
      %p163 = por %p161, %p162
      %p165 = scmp.ne.s32.totalorder %s150, %s164
      %p166 = scmp.eq.s32.totalorder %s30, 0
      %p167 = por %p165, %p166
      %s169 = sadd.s32 %s168, 1
      %p172 = scmp.eq.s32.totalorder %s24, 1
      %p173 = scmp.ne.s32.totalorder %s168, %s170
      %p174 = scmp.eq.s32.totalorder %s24, 0
      %p175 = por %p173, %p174
      %p176 = scmp.ne.s32.totalorder %s168, %s170
      %p177 = scmp.eq.s32.totalorder %s29, 1
      %p178 = por %p176, %p177
      %p179 = scmp.ne.s32.totalorder %s170, %s171
      %p180 = scmp.eq.s32.totalorder %s29, 0
      %p181 = por %p179, %p180
      %p182 = scmp.ne.s32.totalorder %s170, %s171
      %p183 = scmp.eq.s32.totalorder %s30, 1
      %p184 = por %p182, %p183
      %p186 = scmp.ne.s32.totalorder %s171, %s185
      %p187 = scmp.eq.s32.totalorder %s30, 0
      %p188 = por %p186, %p187
      %s190 = sadd.s32 %s189, 1
      %p193 = scmp.eq.s32.totalorder %s24, 1
      %p194 = scmp.ne.s32.totalorder %s189, %s191
      %p195 = scmp.eq.s32.totalorder %s24, 0
      %p196 = por %p194, %p195
      %p197 = scmp.ne.s32.totalorder %s189, %s191
      %p198 = scmp.eq.s32.totalorder %s29, 1
      %p199 = por %p197, %p198
      %p200 = scmp.ne.s32.totalorder %s191, %s192
      %p201 = scmp.eq.s32.totalorder %s29, 0
      %p202 = por %p200, %p201
      %p203 = scmp.ne.s32.totalorder %s191, %s192
      %p204 = scmp.eq.s32.totalorder %s30, 1
      %p205 = por %p203, %p204
      %p207 = scmp.ne.s32.totalorder %s192, %s206
      %p208 = scmp.eq.s32.totalorder %s30, 0
      %p209 = por %p207, %p208
      %s210 = ssub.s32 %s24, %s31
      %p211 = scmp.eq.s32.totalorder %s210, 0
      %s213 = sadd.s32 %s212, 1
      %s214 = scalar_select %p211, %s212, %s213
      %p217 = pneg %p211
      %p218 = scmp.eq.s32.totalorder %s24, 1
      %p219 = por %p217, %p218
      %p220 = scmp.ne.s32.totalorder %s212, %s215
      %p221 = scmp.eq.s32.totalorder %s24, 0
      %p222 = por %p220, %p221
      %p223 = scmp.ne.s32.totalorder %s212, %s215
      %p224 = scmp.eq.s32.totalorder %s29, 1
      %p225 = por %p223, %p224
      %p226 = scmp.ne.s32.totalorder %s215, %s216
      %p227 = scmp.eq.s32.totalorder %s29, 0
      %p228 = por %p226, %p227
      %p229 = scmp.ne.s32.totalorder %s215, %s216
      %p230 = scmp.eq.s32.totalorder %s30, 1
      %p231 = por %p229, %p230
      %p233 = scmp.ne.s32.totalorder %s216, %s232
      %p234 = scmp.eq.s32.totalorder %s30, 0
      %p235 = por %p233, %p234
      %p236 = scmp.le.s32.totalorder 1, %s24
      %p237 = scmp.lt.s32.totalorder %s24, 3
      %p238 = pnand %p236, %p237
      %p239 = pneg %p238
      // Predicated region
      $region9: #{tpu_custom_call.1} parent=5 // pred_check
        _
      $region10: #{tpu_custom_call.1} parent=5 // pred_check_branch
        %241 = sbr.rel (%p238) target = $region12
      $region11: #{tpu_custom_call.1} parent=5 // pred_region
        %s242 = ssub.s32 %s24, 1
        // Predicated region
        $region13: #{tpu_custom_call.1} parent=11 // pred_check
          %p243 = pneg %p97
        $region14: #{tpu_custom_call.1} parent=11 // pred_check_branch
          %245 = sbr.rel (%p243) target = $region16
        $region15: #{tpu_custom_call.1} parent=11 // pred_region
          %s247 = ssub.s32 256, 256
          %248 = vsyncadd [#allocation6], %s247
          %s249 = sshll.u32 [#allocation7], 4
          %s250 = int_to_ptr.vmem [resolvable:$true] %s249
          %255 = dma.hbm_to_vmem [thread:$0]  %s2, 256, %s250, [#allocation6], 64, 64, 4
        $region16: #{tpu_custom_call.1} parent=11 // pred_fallthru
          _
        // Predicated region
        $region17: #{tpu_custom_call.1} parent=11 // pred_check
          %p256 = pneg %p118
        $region18: #{tpu_custom_call.1} parent=11 // pred_check_branch
          %258 = sbr.rel (%p256) target = $region20
        $region19: #{tpu_custom_call.1} parent=11 // pred_region
          _
        $region20: #{tpu_custom_call.1} parent=11 // pred_fallthru
          _
        // Predicated region
        $region21: #{tpu_custom_call.1} parent=11 // pred_check
          %p259 = pneg %p139
        $region22: #{tpu_custom_call.1} parent=11 // pred_check_branch
          %261 = sbr.rel (%p259) target = $region24
        $region23: #{tpu_custom_call.1} parent=11 // pred_region
          %s263 = ssub.s32 256, 256
          %264 = vsyncadd [#allocation9], %s263
          %s265 = sshll.u32 [#allocation8], 4
          %s266 = int_to_ptr.vmem [resolvable:$true] %s265
          %271 = dma.hbm_to_vmem [thread:$0]  %s4, 256, %s266, [#allocation9], 64, 64, 4
        $region24: #{tpu_custom_call.1} parent=11 // pred_fallthru
          _
        // Predicated region
        $region25: #{tpu_custom_call.1} parent=11 // pred_check
          %p272 = pneg %p160
        $region26: #{tpu_custom_call.1} parent=11 // pred_check_branch
          %274 = sbr.rel (%p272) target = $region28
        $region27: #{tpu_custom_call.1} parent=11 // pred_region
          _
        $region28: #{tpu_custom_call.1} parent=11 // pred_fallthru
          _
        // Predicated region
        $region29: #{tpu_custom_call.1} parent=11 // pred_check
          %p275 = pneg %p181
        $region30: #{tpu_custom_call.1} parent=11 // pred_check_branch
          %277 = sbr.rel (%p275) target = $region32
        $region31: #{tpu_custom_call.1} parent=11 // pred_region
          _
        $region32: #{tpu_custom_call.1} parent=11 // pred_fallthru
          _
        // Predicated region
        $region33: #{tpu_custom_call.1} parent=11 // pred_check
          %p278 = pneg %p202
        $region34: #{tpu_custom_call.1} parent=11 // pred_check_branch
          %280 = sbr.rel (%p278) target = $region36
        $region35: #{tpu_custom_call.1} parent=11 // pred_region
          _
        $region36: #{tpu_custom_call.1} parent=11 // pred_fallthru
          _
      $region12: #{tpu_custom_call.1} parent=5 // pred_fallthru
        _
      %p281 = scmp.lt.s32.totalorder %s24, 2
      // Predicated region
      $region37: #{tpu_custom_call.1} parent=5 // pred_check
        %p282 = pneg %p281
      $region38: #{tpu_custom_call.1} parent=5 // pred_check_branch
        %284 = sbr.rel (%p282) target = $region40
      $region39: #{tpu_custom_call.1} parent=5 // pred_region
        // Predicated region
        $region41: #{tpu_custom_call.1} parent=39 // pred_check
          %p285 = pneg %p44
        $region42: #{tpu_custom_call.1} parent=39 // pred_check_branch
          %287 = sbr.rel (%p285) target = $region44
        $region43: #{tpu_custom_call.1} parent=39 // pred_region
          %s288 = sand.u32 %s34, 1
          %s289 = scalar_lea.sflag [#allocation3], %s288
          %s290 = sand.u32 %s34, 1
          %s291 = smul.addr %s290, 8
          %s292 = scalar_lea.vmem [#allocation2], %s291
          %s294 = ssub.s32 128, 128
          %295 = vsyncadd %s289, %s294
          %s296 = smul.addr %s24, 128
          %s297 = scalar_lea.hbm %s0, %s296
          %s299 = sshll.u32 %s292, 4
          %s300 = int_to_ptr.vmem [resolvable:$true] %s299
          %302 = dma.hbm_to_vmem [thread:$0]  %s297, 128, %s300, %s289
        $region44: #{tpu_custom_call.1} parent=39 // pred_fallthru
          _
        // Predicated region
        $region45: #{tpu_custom_call.1} parent=39 // pred_check
          %p303 = pneg %p70
        $region46: #{tpu_custom_call.1} parent=39 // pred_check_branch
          %305 = sbr.rel (%p303) target = $region48
        $region47: #{tpu_custom_call.1} parent=39 // pred_region
          %s306 = sand.u32 %s24, 1
          %s307 = scalar_lea.sflag [#allocation6], %s306
          %s308 = sand.u32 %s60, 1
          %s309 = smul.addr %s308, 8
          %s310 = scalar_lea.vmem [#allocation5], %s309
          %s312 = ssub.s32 128, 128
          %313 = vsyncadd %s307, %s312
          %s314 = smul.addr %s24, 128
          %s315 = scalar_lea.hbm %s1, %s314
          %s317 = sshll.u32 %s310, 4
          %s318 = int_to_ptr.vmem [resolvable:$true] %s317
          %320 = dma.hbm_to_vmem [thread:$0]  %s315, 128, %s318, %s307
        $region48: #{tpu_custom_call.1} parent=39 // pred_fallthru
          _
      $region40: #{tpu_custom_call.1} parent=5 // pred_fallthru
        _
      %p321 = scmp.le.s32.totalorder 1, %s24
      %p322 = scmp.lt.s32.totalorder %s24, 3
      %p323 = pnand %p321, %p322
      %p324 = pneg %p323
      // Predicated region
      $region49: #{tpu_custom_call.1} parent=5 // pred_check
        _
      $region50: #{tpu_custom_call.1} parent=5 // pred_check_branch
        %326 = sbr.rel (%p323) target = $region52
      $region51: #{tpu_custom_call.1} parent=5 // pred_region
        %s327 = ssub.s32 %s24, 1
        %s328 = sand.u32 %s37, 1
        %s329 = scalar_lea.sflag [#allocation3], %s328
        %s330 = sand.u32 %s37, 1
        %s331 = smul.addr %s330, 8
        %s332 = scalar_lea.vmem [#allocation2], %s331
        // Predicated region
        $region53: #{tpu_custom_call.1} parent=51 // pred_check
          %p333 = pneg %p50
        $region54: #{tpu_custom_call.1} parent=51 // pred_check_branch
          %335 = sbr.rel (%p333) target = $region56
        $region55: #{tpu_custom_call.1} parent=51 // pred_region
          %336 = dma.done %s329, 128
        $region56: #{tpu_custom_call.1} parent=51 // pred_fallthru
          _
        %s337 = sand.u32 %s29, 1
        %s338 = scalar_lea.sflag [#allocation6], %s337
        %s339 = sand.u32 %s63, 1
        %s340 = smul.addr %s339, 8
        %s341 = scalar_lea.vmem [#allocation5], %s340
        // Predicated region
        $region57: #{tpu_custom_call.1} parent=51 // pred_check
          %p342 = pneg %p76
        $region58: #{tpu_custom_call.1} parent=51 // pred_check_branch
          %344 = sbr.rel (%p342) target = $region60
        $region59: #{tpu_custom_call.1} parent=51 // pred_region
          %345 = dma.done %s338, 128
        $region60: #{tpu_custom_call.1} parent=51 // pred_fallthru
          _
        // Predicated region
        $region61: #{tpu_custom_call.1} parent=51 // pred_check
          %p346 = pneg %p97
        $region62: #{tpu_custom_call.1} parent=51 // pred_check_branch
          %348 = sbr.rel (%p346) target = $region64
        $region63: #{tpu_custom_call.1} parent=51 // pred_region
          %349 = dma.done [#allocation6], 256
        $region64: #{tpu_custom_call.1} parent=51 // pred_fallthru
          _
        // Predicated region
        $region65: #{tpu_custom_call.1} parent=51 // pred_check
          %p350 = pneg %p139
        $region66: #{tpu_custom_call.1} parent=51 // pred_check_branch
          %352 = sbr.rel (%p350) target = $region68
        $region67: #{tpu_custom_call.1} parent=51 // pred_region
          %353 = dma.done [#allocation9], 256
        $region68: #{tpu_custom_call.1} parent=51 // pred_fallthru
          _
        %s354 = sand.u32 %s37, 1
        %s355 = scalar_lea.sflag [#allocation3], %s354
        %s356 = sand.u32 %s37, 1
        %s357 = smul.addr %s356, 8
        %s358 = scalar_lea.vmem [#allocation2], %s357
        %p359 = pneg %p50
        %p360 = pneg %p47
        %s361 = sand.u32 %s29, 1
        %s362 = scalar_lea.sflag [#allocation6], %s361
        %s363 = sand.u32 %s63, 1
        %s364 = smul.addr %s363, 8
        %s365 = scalar_lea.vmem [#allocation5], %s364
        %p366 = pneg %p76
        %p367 = pneg %p73
        %p368 = pneg %p97
        %p369 = pneg %p94
        %p370 = pneg %p118
        %p371 = pneg %p115
        %p372 = pneg %p139
        %p373 = pneg %p136
        %p374 = pneg %p160
        %p375 = pneg %p157
        %p376 = pneg %p181
        %p377 = pneg %p178
        %p378 = pneg %p202
        %p379 = pneg %p199
        %p380 = pneg %p228
        %p381 = pneg %p225
        %s382 = sand.u32 %s215, 1
        %s383 = scalar_lea.sflag [#allocation4], %s382
        %s384 = sand.u32 %s215, 1
        %s385 = smul.addr %s384, 8
        %s386 = scalar_lea.vmem [#allocation10], %s385
        %v388 = vld [vmem:[%s332] sm:$0xff]
        %v389 = vpack.c.bf16 %v388, %v388
        %v390 = vld [vmem:[#allocation7] sm:$0xf]
        %v391 = vld [vmem:[#allocation7 + $0x4] sm:$0xf]
        %v392 = vld [vmem:[#allocation7 + $0x8] sm:$0xf]
        %v393 = vld [vmem:[#allocation7 + $0xc] sm:$0xf]
        %v394 = vld [vmem:[%s3] sm:$0x1]
        %v396 = vlaneseq
        %v397 = vshrl.u32 %v396, 7
        %v398 = vsub.s32 0, %v397
        %v399 = vrot.slane %v394, %v398
        %v405 = vunpack.c.l.b16 %v390
        %v406 = vunpack.c.l.b16 %v391
        %v407 = vunpack.c.l.b16 %v392
        %v408 = vunpack.c.l.b16 %v393
        %v409 = vpack.c.b16 %v406, %v405
        %v410 = vpack.c.b16 %v408, %v407
        %vm413 = vcmask 261120
        %v415 = vsel %vm413, %v389, 0
        %417 = vmatprep.subr.bf16.mxu0 0
        %418 = vmatpush1.bf16.msra.mxu0 %v409
        %419 = vmatprep.subr.bf16.mxu0 0
        %420 = vmatpush1.bf16.msra.mxu0 %v410
        %421 = vmatprep.subr.bf16.mxu0 0
        %422 = vmatpush1.bf16.msra.mxu0 0
        %423 = vmatprep.subr.bf16.mxu0 0
        %424 = vmatpush1.bf16.msra.mxu0 0
        %425 = vmatprep.subr.bf16.mxu0 0
        %426 = vmatpush1.bf16.msra.mxu0 0
        %427 = vmatprep.subr.bf16.mxu0 0
        %428 = vmatpush1.bf16.msra.mxu0 0
        %429 = vmatprep.subr.bf16.mxu0 0
        %430 = vmatpush1.bf16.msra.mxu0 0
        %431 = vmatprep.subr.bf16.mxu0 0
        %432 = vmatpush1.bf16.msra.mxu0 0
        %433 = vmatprep.subr.bf16.mxu0 0
        %434 = vmatpush1.bf16.msra.mxu0 0
        %435 = vmatprep.subr.bf16.mxu0 0
        %436 = vmatpush1.bf16.msra.mxu0 0
        %437 = vmatprep.subr.bf16.mxu0 0
        %438 = vmatpush1.bf16.msra.mxu0 0
        %439 = vmatprep.subr.bf16.mxu0 0
        %440 = vmatpush1.bf16.msra.mxu0 0
        %441 = vmatprep.subr.bf16.mxu0 0
        %442 = vmatpush1.bf16.msra.mxu0 0
        %443 = vmatprep.subr.bf16.mxu0 0
        %444 = vmatpush1.bf16.msra.mxu0 0
        %445 = vmatprep.subr.bf16.mxu0 0
        %446 = vmatpush1.bf16.msra.mxu0 0
        %447 = vmatprep.subr.bf16.mxu0 0
        %448 = vmatpush1.bf16.msra.mxu0 0
        %449 = vmatprep.mubr.bf16.mxu0 0
        %450 = vmatmul.mubr.bf16.gmra.mrb[0].mxu0 %v415
        %v451 = vpop.f32.mrb[0].mxu0
        %v452 = vadd.f32 %v399, %v451
        %v453 = vpop.f32.mrb[0].mxu0
        %v454 = vpop.f32.mrb[0].mxu0
        %v455 = vpop.f32.mrb[0].mxu0
        %456 = vdwg.mxu0
        %v457 = vld [vmem:[%s341] sm:$0xff]
        %vm458 = vcmp.eq.f32.partialorder %v457, 0.0
        %v459 = vsel %vm458, -1e+09, 0.0
        %v460 = vpack.c.bf16 %v452, %v452
        %462 = vrot.lane.b32.xlu0 %v460, 96
        %v463 = vpop.permute.xlu0 %462
        %vm464 = vcmask 64512
        %v466 = vsel %vm464, %v460, 0
        %v469 = vsel %vm464, %v463, 0
        %471 = vmatprep.subr.bf16.mxu0 0
        %472 = vmatpush1.bf16.xpose.msra.mxu0 %v469
        %473 = vmatprep.subr.bf16.mxu0 0
        %474 = vmatpush1.bf16.xpose.msra.mxu0 0
        %475 = vmatprep.subr.bf16.mxu0 0
        %476 = vmatpush1.bf16.xpose.msra.mxu0 0
        %477 = vmatprep.subr.bf16.mxu0 0
        %478 = vmatpush1.bf16.xpose.msra.mxu0 0
        %479 = vmatprep.subr.bf16.mxu0 0
        %480 = vmatpush1.bf16.xpose.msra.mxu0 0
        %481 = vmatprep.subr.bf16.mxu0 0
        %482 = vmatpush1.bf16.xpose.msra.mxu0 0
        %483 = vmatprep.subr.bf16.mxu0 0
        %484 = vmatpush1.bf16.xpose.msra.mxu0 0
        %485 = vmatprep.subr.bf16.mxu0 0
        %486 = vmatpush1.bf16.xpose.msra.mxu0 0
        %487 = vmatprep.subr.bf16.mxu0 0
        %488 = vmatpush1.bf16.xpose.msra.mxu0 0
        %489 = vmatprep.subr.bf16.mxu0 0
        %490 = vmatpush1.bf16.xpose.msra.mxu0 0
        %491 = vmatprep.subr.bf16.mxu0 0
        %492 = vmatpush1.bf16.xpose.msra.mxu0 0
        %493 = vmatprep.subr.bf16.mxu0 0
        %494 = vmatpush1.bf16.xpose.msra.mxu0 0
        %495 = vmatprep.subr.bf16.mxu0 0
        %496 = vmatpush1.bf16.xpose.msra.mxu0 0
        %497 = vmatprep.subr.bf16.mxu0 0
        %498 = vmatpush1.bf16.xpose.msra.mxu0 0
        %499 = vmatprep.subr.bf16.mxu0 0
        %500 = vmatpush1.bf16.xpose.msra.mxu0 0
        %501 = vmatprep.subr.bf16.mxu0 0
        %502 = vmatpush1.bf16.xpose.msra.mxu0 0
        %503 = vmatprep.mubr.bf16.mxu0 0
        %504 = vmatmul.mubr.bf16.gmra.mrb[0].mxu0 %v466
        %v505 = vpop.f32.mrb[0].mxu0
        %v506 = vadd.f32 0.0, %v505
        %v507 = vpop.f32.mrb[0].mxu0
        %v508 = vpop.f32.mrb[0].mxu0
        %v509 = vpop.f32.mrb[0].mxu0
        %510 = vdwg.mxu0
        %v511 = vmul.f32 %v506, 0.35355338
        %v512 = vadd.f32 %v511, %v459
        %v513 = vsel %vm464, %v512, -inf
        %514 = vmax.xlane.f32.xlu0 %v513
        %v515 = vpop.xlane.xlu0 %514
        %v516 = vsub.f32 %v512, %v515
        %v517 = vmul.f32 %v516, 1.442695
        %v518 = vpow.pop %v517
        %v519 = vsel %vm464, %v518, 0.0
        %520 = vadd.xlane.f32.xlu0 %v519
        %v521 = vpop.xlane.xlu0 %520
        %v522 = vrcp.pop %v521
        %v523 = vmul.f32 %v518, %v522
        %v524 = vpack.c.bf16 %v523, %v523
        %525 = vrot.lane.b32.xlu0 %v460, 64
        %v526 = vpop.permute.xlu0 %525
        %v528 = vsel %vm464, %v524, 0
        %vm530 = vcmask 1043456
        %v532 = vsel %vm530, %v526, 0
        %534 = vmatprep.subr.bf16.mxu0 0
        %535 = vmatpush1.bf16.msra.mxu0 %v532
        %536 = vmatprep.subr.bf16.mxu0 0
        %537 = vmatpush1.bf16.msra.mxu0 0
        %538 = vmatprep.subr.bf16.mxu0 0
        %539 = vmatpush1.bf16.msra.mxu0 0
        %540 = vmatprep.subr.bf16.mxu0 0
        %541 = vmatpush1.bf16.msra.mxu0 0
        %542 = vmatprep.subr.bf16.mxu0 0
        %543 = vmatpush1.bf16.msra.mxu0 0
        %544 = vmatprep.subr.bf16.mxu0 0
        %545 = vmatpush1.bf16.msra.mxu0 0
        %546 = vmatprep.subr.bf16.mxu0 0
        %547 = vmatpush1.bf16.msra.mxu0 0
        %548 = vmatprep.subr.bf16.mxu0 0
        %549 = vmatpush1.bf16.msra.mxu0 0
        %550 = vmatprep.subr.bf16.mxu0 0
        %551 = vmatpush1.bf16.msra.mxu0 0
        %552 = vmatprep.subr.bf16.mxu0 0
        %553 = vmatpush1.bf16.msra.mxu0 0
        %554 = vmatprep.subr.bf16.mxu0 0
        %555 = vmatpush1.bf16.msra.mxu0 0
        %556 = vmatprep.subr.bf16.mxu0 0
        %557 = vmatpush1.bf16.msra.mxu0 0
        %558 = vmatprep.subr.bf16.mxu0 0
        %559 = vmatpush1.bf16.msra.mxu0 0
        %560 = vmatprep.subr.bf16.mxu0 0
        %561 = vmatpush1.bf16.msra.mxu0 0
        %562 = vmatprep.subr.bf16.mxu0 0
        %563 = vmatpush1.bf16.msra.mxu0 0
        %564 = vmatprep.subr.bf16.mxu0 0
        %565 = vmatpush1.bf16.msra.mxu0 0
        %566 = vmatprep.mubr.bf16.mxu0 0
        %567 = vmatmul.mubr.bf16.gmra.mrb[0].mxu0 %v528
        %v568 = vpop.f32.mrb[0].mxu0
        %v569 = vadd.f32 0.0, %v568
        %v570 = vpop.f32.mrb[0].mxu0
        %v571 = vpop.f32.mrb[0].mxu0
        %v572 = vpop.f32.mrb[0].mxu0
        %573 = vdwg.mxu0
        %v574 = vpack.c.bf16 %v569, %v569
        %v575 = vld [vmem:[#allocation8] sm:$0xf]
        %576 = vrot.lane.b32.xlu0 %v460, 120
        %v577 = vpop.permute.xlu0 %576
        %578 = vrot.lane.b32.xlu0 %v460, 88
        %v579 = vpop.permute.xlu0 %578
        %v581 = vsel %vm464, %v577, 0
        %v584 = vsel %vm464, %v579, 0
        %586 = vmatprep.subr.bf16.mxu0 0
        %587 = vmatpush1.bf16.xpose.msra.mxu0 %v584
        %588 = vmatprep.subr.bf16.mxu0 0
        %589 = vmatpush1.bf16.xpose.msra.mxu0 0
        %590 = vmatprep.subr.bf16.mxu0 0
        %591 = vmatpush1.bf16.xpose.msra.mxu0 0
        %592 = vmatprep.subr.bf16.mxu0 0
        %593 = vmatpush1.bf16.xpose.msra.mxu0 0
        %594 = vmatprep.subr.bf16.mxu0 0
        %595 = vmatpush1.bf16.xpose.msra.mxu0 0
        %596 = vmatprep.subr.bf16.mxu0 0
        %597 = vmatpush1.bf16.xpose.msra.mxu0 0
        %598 = vmatprep.subr.bf16.mxu0 0
        %599 = vmatpush1.bf16.xpose.msra.mxu0 0
        %600 = vmatprep.subr.bf16.mxu0 0
        %601 = vmatpush1.bf16.xpose.msra.mxu0 0
        %602 = vmatprep.subr.bf16.mxu0 0
        %603 = vmatpush1.bf16.xpose.msra.mxu0 0
        %604 = vmatprep.subr.bf16.mxu0 0
        %605 = vmatpush1.bf16.xpose.msra.mxu0 0
        %606 = vmatprep.subr.bf16.mxu0 0
        %607 = vmatpush1.bf16.xpose.msra.mxu0 0
        %608 = vmatprep.subr.bf16.mxu0 0
        %609 = vmatpush1.bf16.xpose.msra.mxu0 0
        %610 = vmatprep.subr.bf16.mxu0 0
        %611 = vmatpush1.bf16.xpose.msra.mxu0 0
        %612 = vmatprep.subr.bf16.mxu0 0
        %613 = vmatpush1.bf16.xpose.msra.mxu0 0
        %614 = vmatprep.subr.bf16.mxu0 0
        %615 = vmatpush1.bf16.xpose.msra.mxu0 0
        %616 = vmatprep.subr.bf16.mxu0 0
        %617 = vmatpush1.bf16.xpose.msra.mxu0 0
        %618 = vmatprep.mubr.bf16.mxu0 0
        %619 = vmatmul.mubr.bf16.gmra.mrb[0].mxu0 %v581
        %v620 = vpop.f32.mrb[0].mxu0
        %v621 = vadd.f32 0.0, %v620
        %v622 = vpop.f32.mrb[0].mxu0
        %v623 = vpop.f32.mrb[0].mxu0
        %v624 = vpop.f32.mrb[0].mxu0
        %625 = vdwg.mxu0
        %v626 = vmul.f32 %v621, 0.35355338
        %v627 = vadd.f32 %v626, %v459
        %v628 = vsel %vm464, %v627, -inf
        %629 = vmax.xlane.f32.xlu0 %v628
        %v630 = vpop.xlane.xlu0 %629
        %v631 = vsub.f32 %v627, %v630
        %v632 = vmul.f32 %v631, 1.442695
        %v633 = vpow.pop %v632
        %v634 = vsel %vm464, %v633, 0.0
        %635 = vadd.xlane.f32.xlu0 %v634
        %v636 = vpop.xlane.xlu0 %635
        %v637 = vrcp.pop %v636
        %v638 = vmul.f32 %v633, %v637
        %v639 = vpack.c.bf16 %v638, %v638
        %640 = vrot.lane.b32.xlu0 %v460, 56
        %v641 = vpop.permute.xlu0 %640
        %v643 = vsel %vm464, %v639, 0
        %v646 = vsel %vm530, %v641, 0
        %648 = vmatprep.subr.bf16.mxu0 0
        %649 = vmatpush1.bf16.msra.mxu0 %v646
        %650 = vmatprep.subr.bf16.mxu0 0
        %651 = vmatpush1.bf16.msra.mxu0 0
        %652 = vmatprep.subr.bf16.mxu0 0
        %653 = vmatpush1.bf16.msra.mxu0 0
        %654 = vmatprep.subr.bf16.mxu0 0
        %655 = vmatpush1.bf16.msra.mxu0 0
        %656 = vmatprep.subr.bf16.mxu0 0
        %657 = vmatpush1.bf16.msra.mxu0 0
        %658 = vmatprep.subr.bf16.mxu0 0
        %659 = vmatpush1.bf16.msra.mxu0 0
        %660 = vmatprep.subr.bf16.mxu0 0
        %661 = vmatpush1.bf16.msra.mxu0 0
        %662 = vmatprep.subr.bf16.mxu0 0
        %663 = vmatpush1.bf16.msra.mxu0 0
        %664 = vmatprep.subr.bf16.mxu0 0
        %665 = vmatpush1.bf16.msra.mxu0 0
        %666 = vmatprep.subr.bf16.mxu0 0
        %667 = vmatpush1.bf16.msra.mxu0 0
        %668 = vmatprep.subr.bf16.mxu0 0
        %669 = vmatpush1.bf16.msra.mxu0 0
        %670 = vmatprep.subr.bf16.mxu0 0
        %671 = vmatpush1.bf16.msra.mxu0 0
        %672 = vmatprep.subr.bf16.mxu0 0
        %673 = vmatpush1.bf16.msra.mxu0 0
        %674 = vmatprep.subr.bf16.mxu0 0
        %675 = vmatpush1.bf16.msra.mxu0 0
        %676 = vmatprep.subr.bf16.mxu0 0
        %677 = vmatpush1.bf16.msra.mxu0 0
        %678 = vmatprep.subr.bf16.mxu0 0
        %679 = vmatpush1.bf16.msra.mxu0 0
        %680 = vmatprep.mubr.bf16.mxu0 0
        %681 = vmatmul.mubr.bf16.gmra.mrb[0].mxu0 %v643
        %v682 = vpop.f32.mrb[0].mxu0
        %v683 = vadd.f32 0.0, %v682
        %v684 = vpop.f32.mrb[0].mxu0
        %v685 = vpop.f32.mrb[0].mxu0
        %v686 = vpop.f32.mrb[0].mxu0
        %687 = vdwg.mxu0
        %v688 = vpack.c.bf16 %v683, %v683
        %v689 = vld [vmem:[#allocation8 + $0x4] sm:$0xf]
        %v691 = vsel %vm464, %v688, 0
        %v694 = vsel %vm530, %v689, 0
        %696 = vmatprep.subr.bf16.mxu0 0
        %697 = vmatpush1.bf16.msra.mxu0 %v694
        %698 = vmatprep.subr.bf16.mxu0 0
        %699 = vmatpush1.bf16.msra.mxu0 0
        %700 = vmatprep.subr.bf16.mxu0 0
        %701 = vmatpush1.bf16.msra.mxu0 0
        %702 = vmatprep.subr.bf16.mxu0 0
        %703 = vmatpush1.bf16.msra.mxu0 0
        %704 = vmatprep.subr.bf16.mxu0 0
        %705 = vmatpush1.bf16.msra.mxu0 0
        %706 = vmatprep.subr.bf16.mxu0 0
        %707 = vmatpush1.bf16.msra.mxu0 0
        %708 = vmatprep.subr.bf16.mxu0 0
        %709 = vmatpush1.bf16.msra.mxu0 0
        %710 = vmatprep.subr.bf16.mxu0 0
        %711 = vmatpush1.bf16.msra.mxu0 0
        %712 = vmatprep.subr.bf16.mxu0 0
        %713 = vmatpush1.bf16.msra.mxu0 0
        %714 = vmatprep.subr.bf16.mxu0 0
        %715 = vmatpush1.bf16.msra.mxu0 0
        %716 = vmatprep.subr.bf16.mxu0 0
        %717 = vmatpush1.bf16.msra.mxu0 0
        %718 = vmatprep.subr.bf16.mxu0 0
        %719 = vmatpush1.bf16.msra.mxu0 0
        %720 = vmatprep.subr.bf16.mxu0 0
        %721 = vmatpush1.bf16.msra.mxu0 0
        %722 = vmatprep.subr.bf16.mxu0 0
        %723 = vmatpush1.bf16.msra.mxu0 0
        %724 = vmatprep.subr.bf16.mxu0 0
        %725 = vmatpush1.bf16.msra.mxu0 0
        %726 = vmatprep.subr.bf16.mxu0 0
        %727 = vmatpush1.bf16.msra.mxu0 0
        %728 = vmatprep.mubr.bf16.mxu0 0
        %729 = vmatmul.mubr.bf16.gmra.mrb[0].mxu0 %v691
        %v730 = vpop.f32.mrb[0].mxu0
        %v731 = vadd.f32 0.0, %v730
        %v732 = vpop.f32.mrb[0].mxu0
        %v733 = vpop.f32.mrb[0].mxu0
        %v734 = vpop.f32.mrb[0].mxu0
        %735 = vdwg.mxu0
        %v737 = vsel %vm464, %v574, 0
        %v740 = vsel %vm530, %v575, 0
        %742 = vmatprep.subr.bf16.mxu0 0
        %743 = vmatpush1.bf16.msra.mxu0 %v740
        %744 = vmatprep.subr.bf16.mxu0 0
        %745 = vmatpush1.bf16.msra.mxu0 0
        %746 = vmatprep.subr.bf16.mxu0 0
        %747 = vmatpush1.bf16.msra.mxu0 0
        %748 = vmatprep.subr.bf16.mxu0 0
        %749 = vmatpush1.bf16.msra.mxu0 0
        %750 = vmatprep.subr.bf16.mxu0 0
        %751 = vmatpush1.bf16.msra.mxu0 0
        %752 = vmatprep.subr.bf16.mxu0 0
        %753 = vmatpush1.bf16.msra.mxu0 0
        %754 = vmatprep.subr.bf16.mxu0 0
        %755 = vmatpush1.bf16.msra.mxu0 0
        %756 = vmatprep.subr.bf16.mxu0 0
        %757 = vmatpush1.bf16.msra.mxu0 0
        %758 = vmatprep.subr.bf16.mxu0 0
        %759 = vmatpush1.bf16.msra.mxu0 0
        %760 = vmatprep.subr.bf16.mxu0 0
        %761 = vmatpush1.bf16.msra.mxu0 0
        %762 = vmatprep.subr.bf16.mxu0 0
        %763 = vmatpush1.bf16.msra.mxu0 0
        %764 = vmatprep.subr.bf16.mxu0 0
        %765 = vmatpush1.bf16.msra.mxu0 0
        %766 = vmatprep.subr.bf16.mxu0 0
        %767 = vmatpush1.bf16.msra.mxu0 0
        %768 = vmatprep.subr.bf16.mxu0 0
        %769 = vmatpush1.bf16.msra.mxu0 0
        %770 = vmatprep.subr.bf16.mxu0 0
        %771 = vmatpush1.bf16.msra.mxu0 0
        %772 = vmatprep.subr.bf16.mxu0 0
        %773 = vmatpush1.bf16.msra.mxu0 0
        %774 = vmatprep.mubr.bf16.mxu0 0
        %775 = vmatmul.mubr.bf16.gmra.mrb[0].mxu0 %v737
        %v776 = vpop.f32.mrb[0].mxu0
        %v777 = vadd.f32 %v731, %v776
        %v778 = vpop.f32.mrb[0].mxu0
        %v779 = vpop.f32.mrb[0].mxu0
        %v780 = vpop.f32.mrb[0].mxu0
        %781 = vdwg.mxu0
        %782 = vrot.lane.b32.xlu0 %v460, 112
        %v783 = vpop.permute.xlu0 %782
        %784 = vrot.lane.b32.xlu0 %v460, 80
        %v785 = vpop.permute.xlu0 %784
        %v787 = vsel %vm464, %v783, 0
        %v790 = vsel %vm464, %v785, 0
        %792 = vmatprep.subr.bf16.mxu0 0
        %793 = vmatpush1.bf16.xpose.msra.mxu0 %v790
        %794 = vmatprep.subr.bf16.mxu0 0
        %795 = vmatpush1.bf16.xpose.msra.mxu0 0
        %796 = vmatprep.subr.bf16.mxu0 0
        %797 = vmatpush1.bf16.xpose.msra.mxu0 0
        %798 = vmatprep.subr.bf16.mxu0 0
        %799 = vmatpush1.bf16.xpose.msra.mxu0 0
        %800 = vmatprep.subr.bf16.mxu0 0
        %801 = vmatpush1.bf16.xpose.msra.mxu0 0
        %802 = vmatprep.subr.bf16.mxu0 0
        %803 = vmatpush1.bf16.xpose.msra.mxu0 0
        %804 = vmatprep.subr.bf16.mxu0 0
        %805 = vmatpush1.bf16.xpose.msra.mxu0 0
        %806 = vmatprep.subr.bf16.mxu0 0
        %807 = vmatpush1.bf16.xpose.msra.mxu0 0
        %808 = vmatprep.subr.bf16.mxu0 0
        %809 = vmatpush1.bf16.xpose.msra.mxu0 0
        %810 = vmatprep.subr.bf16.mxu0 0
        %811 = vmatpush1.bf16.xpose.msra.mxu0 0
        %812 = vmatprep.subr.bf16.mxu0 0
        %813 = vmatpush1.bf16.xpose.msra.mxu0 0
        %814 = vmatprep.subr.bf16.mxu0 0
        %815 = vmatpush1.bf16.xpose.msra.mxu0 0
        %816 = vmatprep.subr.bf16.mxu0 0
        %817 = vmatpush1.bf16.xpose.msra.mxu0 0
        %818 = vmatprep.subr.bf16.mxu0 0
        %819 = vmatpush1.bf16.xpose.msra.mxu0 0
        %820 = vmatprep.subr.bf16.mxu0 0
        %821 = vmatpush1.bf16.xpose.msra.mxu0 0
        %822 = vmatprep.subr.bf16.mxu0 0
        %823 = vmatpush1.bf16.xpose.msra.mxu0 0
        %824 = vmatprep.mubr.bf16.mxu0 0
        %825 = vmatmul.mubr.bf16.gmra.mrb[0].mxu0 %v787
        %v826 = vpop.f32.mrb[0].mxu0
        %v827 = vadd.f32 0.0, %v826
        %v828 = vpop.f32.mrb[0].mxu0
        %v829 = vpop.f32.mrb[0].mxu0
        %v830 = vpop.f32.mrb[0].mxu0
        %831 = vdwg.mxu0
        %v832 = vmul.f32 %v827, 0.35355338
        %v833 = vadd.f32 %v832, %v459
        %v834 = vsel %vm464, %v833, -inf
        %835 = vmax.xlane.f32.xlu0 %v834
        %v836 = vpop.xlane.xlu0 %835
        %v837 = vsub.f32 %v833, %v836
        %v838 = vmul.f32 %v837, 1.442695
        %v839 = vpow.pop %v838
        %v840 = vsel %vm464, %v839, 0.0
        %841 = vadd.xlane.f32.xlu0 %v840
        %v842 = vpop.xlane.xlu0 %841
        %v843 = vrcp.pop %v842
        %v844 = vmul.f32 %v839, %v843
        %v845 = vpack.c.bf16 %v844, %v844
        %846 = vrot.lane.b32.xlu0 %v460, 48
        %v847 = vpop.permute.xlu0 %846
        %v849 = vsel %vm464, %v845, 0
        %v852 = vsel %vm530, %v847, 0
        %854 = vmatprep.subr.bf16.mxu0 0
        %855 = vmatpush1.bf16.msra.mxu0 %v852
        %856 = vmatprep.subr.bf16.mxu0 0
        %857 = vmatpush1.bf16.msra.mxu0 0
        %858 = vmatprep.subr.bf16.mxu0 0
        %859 = vmatpush1.bf16.msra.mxu0 0
        %860 = vmatprep.subr.bf16.mxu0 0
        %861 = vmatpush1.bf16.msra.mxu0 0
        %862 = vmatprep.subr.bf16.mxu0 0
        %863 = vmatpush1.bf16.msra.mxu0 0
        %864 = vmatprep.subr.bf16.mxu0 0
        %865 = vmatpush1.bf16.msra.mxu0 0
        %866 = vmatprep.subr.bf16.mxu0 0
        %867 = vmatpush1.bf16.msra.mxu0 0
        %868 = vmatprep.subr.bf16.mxu0 0
        %869 = vmatpush1.bf16.msra.mxu0 0
        %870 = vmatprep.subr.bf16.mxu0 0
        %871 = vmatpush1.bf16.msra.mxu0 0
        %872 = vmatprep.subr.bf16.mxu0 0
        %873 = vmatpush1.bf16.msra.mxu0 0
        %874 = vmatprep.subr.bf16.mxu0 0
        %875 = vmatpush1.bf16.msra.mxu0 0
        %876 = vmatprep.subr.bf16.mxu0 0
        %877 = vmatpush1.bf16.msra.mxu0 0
        %878 = vmatprep.subr.bf16.mxu0 0
        %879 = vmatpush1.bf16.msra.mxu0 0
        %880 = vmatprep.subr.bf16.mxu0 0
        %881 = vmatpush1.bf16.msra.mxu0 0
        %882 = vmatprep.subr.bf16.mxu0 0
        %883 = vmatpush1.bf16.msra.mxu0 0
        %884 = vmatprep.subr.bf16.mxu0 0
        %885 = vmatpush1.bf16.msra.mxu0 0
        %886 = vmatprep.mubr.bf16.mxu0 0
        %887 = vmatmul.mubr.bf16.gmra.mrb[0].mxu0 %v849
        %v888 = vpop.f32.mrb[0].mxu0
        %v889 = vadd.f32 0.0, %v888
        %v890 = vpop.f32.mrb[0].mxu0
        %v891 = vpop.f32.mrb[0].mxu0
        %v892 = vpop.f32.mrb[0].mxu0
        %893 = vdwg.mxu0
        %v894 = vpack.c.bf16 %v889, %v889
        %v895 = vld [vmem:[#allocation8 + $0x8] sm:$0xf]
        %v897 = vsel %vm464, %v894, 0
        %v900 = vsel %vm530, %v895, 0
        %902 = vmatprep.subr.bf16.mxu0 0
        %903 = vmatpush1.bf16.msra.mxu0 %v900
        %904 = vmatprep.subr.bf16.mxu0 0
        %905 = vmatpush1.bf16.msra.mxu0 0
        %906 = vmatprep.subr.bf16.mxu0 0
        %907 = vmatpush1.bf16.msra.mxu0 0
        %908 = vmatprep.subr.bf16.mxu0 0
        %909 = vmatpush1.bf16.msra.mxu0 0
        %910 = vmatprep.subr.bf16.mxu0 0
        %911 = vmatpush1.bf16.msra.mxu0 0
        %912 = vmatprep.subr.bf16.mxu0 0
        %913 = vmatpush1.bf16.msra.mxu0 0
        %914 = vmatprep.subr.bf16.mxu0 0
        %915 = vmatpush1.bf16.msra.mxu0 0
        %916 = vmatprep.subr.bf16.mxu0 0
        %917 = vmatpush1.bf16.msra.mxu0 0
        %918 = vmatprep.subr.bf16.mxu0 0
        %919 = vmatpush1.bf16.msra.mxu0 0
        %920 = vmatprep.subr.bf16.mxu0 0
        %921 = vmatpush1.bf16.msra.mxu0 0
        %922 = vmatprep.subr.bf16.mxu0 0
        %923 = vmatpush1.bf16.msra.mxu0 0
        %924 = vmatprep.subr.bf16.mxu0 0
        %925 = vmatpush1.bf16.msra.mxu0 0
        %926 = vmatprep.subr.bf16.mxu0 0
        %927 = vmatpush1.bf16.msra.mxu0 0
        %928 = vmatprep.subr.bf16.mxu0 0
        %929 = vmatpush1.bf16.msra.mxu0 0
        %930 = vmatprep.subr.bf16.mxu0 0
        %931 = vmatpush1.bf16.msra.mxu0 0
        %932 = vmatprep.subr.bf16.mxu0 0
        %933 = vmatpush1.bf16.msra.mxu0 0
        %934 = vmatprep.mubr.bf16.mxu0 0
        %935 = vmatmul.mubr.bf16.gmra.mrb[0].mxu0 %v897
        %v936 = vpop.f32.mrb[0].mxu0
        %v937 = vadd.f32 0.0, %v936
        %v938 = vpop.f32.mrb[0].mxu0
        %v939 = vpop.f32.mrb[0].mxu0
        %v940 = vpop.f32.mrb[0].mxu0
        %941 = vdwg.mxu0
        %v942 = vadd.f32 %v777, %v937
        %943 = vrot.lane.b32.xlu0 %v460, 104
        %v944 = vpop.permute.xlu0 %943
        %945 = vrot.lane.b32.xlu0 %v460, 72
        %v946 = vpop.permute.xlu0 %945
        %v948 = vsel %vm464, %v944, 0
        %v951 = vsel %vm464, %v946, 0
        %953 = vmatprep.subr.bf16.mxu0 0
        %954 = vmatpush1.bf16.xpose.msra.mxu0 %v951
        %955 = vmatprep.subr.bf16.mxu0 0
        %956 = vmatpush1.bf16.xpose.msra.mxu0 0
        %957 = vmatprep.subr.bf16.mxu0 0
        %958 = vmatpush1.bf16.xpose.msra.mxu0 0
        %959 = vmatprep.subr.bf16.mxu0 0
        %960 = vmatpush1.bf16.xpose.msra.mxu0 0
        %961 = vmatprep.subr.bf16.mxu0 0
        %962 = vmatpush1.bf16.xpose.msra.mxu0 0
        %963 = vmatprep.subr.bf16.mxu0 0
        %964 = vmatpush1.bf16.xpose.msra.mxu0 0
        %965 = vmatprep.subr.bf16.mxu0 0
        %966 = vmatpush1.bf16.xpose.msra.mxu0 0
        %967 = vmatprep.subr.bf16.mxu0 0
        %968 = vmatpush1.bf16.xpose.msra.mxu0 0
        %969 = vmatprep.subr.bf16.mxu0 0
        %970 = vmatpush1.bf16.xpose.msra.mxu0 0
        %971 = vmatprep.subr.bf16.mxu0 0
        %972 = vmatpush1.bf16.xpose.msra.mxu0 0
        %973 = vmatprep.subr.bf16.mxu0 0
        %974 = vmatpush1.bf16.xpose.msra.mxu0 0
        %975 = vmatprep.subr.bf16.mxu0 0
        %976 = vmatpush1.bf16.xpose.msra.mxu0 0
        %977 = vmatprep.subr.bf16.mxu0 0
        %978 = vmatpush1.bf16.xpose.msra.mxu0 0
        %979 = vmatprep.subr.bf16.mxu0 0
        %980 = vmatpush1.bf16.xpose.msra.mxu0 0
        %981 = vmatprep.subr.bf16.mxu0 0
        %982 = vmatpush1.bf16.xpose.msra.mxu0 0
        %983 = vmatprep.subr.bf16.mxu0 0
        %984 = vmatpush1.bf16.xpose.msra.mxu0 0
        %985 = vmatprep.mubr.bf16.mxu0 0
        %986 = vmatmul.mubr.bf16.gmra.mrb[0].mxu0 %v948
        %v987 = vpop.f32.mrb[0].mxu0
        %v988 = vadd.f32 0.0, %v987
        %v989 = vpop.f32.mrb[0].mxu0
        %v990 = vpop.f32.mrb[0].mxu0
        %v991 = vpop.f32.mrb[0].mxu0
        %992 = vdwg.mxu0
        %v993 = vmul.f32 %v988, 0.35355338
        %v994 = vadd.f32 %v993, %v459
        %v995 = vsel %vm464, %v994, -inf
        %996 = vmax.xlane.f32.xlu0 %v995
        %v997 = vpop.xlane.xlu0 %996
        %v998 = vsub.f32 %v994, %v997
        %v999 = vmul.f32 %v998, 1.442695
        %v1000 = vpow.pop %v999
        %v1001 = vsel %vm464, %v1000, 0.0
        %1002 = vadd.xlane.f32.xlu0 %v1001
        %v1003 = vpop.xlane.xlu0 %1002
        %v1004 = vrcp.pop %v1003
        %v1005 = vmul.f32 %v1000, %v1004
        %v1006 = vpack.c.bf16 %v1005, %v1005
        %1007 = vrot.lane.b32.xlu0 %v460, 40
        %v1008 = vpop.permute.xlu0 %1007
        %v1010 = vsel %vm464, %v1006, 0
        %v1013 = vsel %vm530, %v1008, 0
        %1015 = vmatprep.subr.bf16.mxu0 0
        %1016 = vmatpush1.bf16.msra.mxu0 %v1013
        %1017 = vmatprep.subr.bf16.mxu0 0
        %1018 = vmatpush1.bf16.msra.mxu0 0
        %1019 = vmatprep.subr.bf16.mxu0 0
        %1020 = vmatpush1.bf16.msra.mxu0 0
        %1021 = vmatprep.subr.bf16.mxu0 0
        %1022 = vmatpush1.bf16.msra.mxu0 0
        %1023 = vmatprep.subr.bf16.mxu0 0
        %1024 = vmatpush1.bf16.msra.mxu0 0
        %1025 = vmatprep.subr.bf16.mxu0 0
        %1026 = vmatpush1.bf16.msra.mxu0 0
        %1027 = vmatprep.subr.bf16.mxu0 0
        %1028 = vmatpush1.bf16.msra.mxu0 0
        %1029 = vmatprep.subr.bf16.mxu0 0
        %1030 = vmatpush1.bf16.msra.mxu0 0
        %1031 = vmatprep.subr.bf16.mxu0 0
        %1032 = vmatpush1.bf16.msra.mxu0 0
        %1033 = vmatprep.subr.bf16.mxu0 0
        %1034 = vmatpush1.bf16.msra.mxu0 0
        %1035 = vmatprep.subr.bf16.mxu0 0
        %1036 = vmatpush1.bf16.msra.mxu0 0
        %1037 = vmatprep.subr.bf16.mxu0 0
        %1038 = vmatpush1.bf16.msra.mxu0 0
        %1039 = vmatprep.subr.bf16.mxu0 0
        %1040 = vmatpush1.bf16.msra.mxu0 0
        %1041 = vmatprep.subr.bf16.mxu0 0
        %1042 = vmatpush1.bf16.msra.mxu0 0
        %1043 = vmatprep.subr.bf16.mxu0 0
        %1044 = vmatpush1.bf16.msra.mxu0 0
        %1045 = vmatprep.subr.bf16.mxu0 0
        %1046 = vmatpush1.bf16.msra.mxu0 0
        %1047 = vmatprep.mubr.bf16.mxu0 0
        %1048 = vmatmul.mubr.bf16.gmra.mrb[0].mxu0 %v1010
        %v1049 = vpop.f32.mrb[0].mxu0
        %v1050 = vadd.f32 0.0, %v1049
        %v1051 = vpop.f32.mrb[0].mxu0
        %v1052 = vpop.f32.mrb[0].mxu0
        %v1053 = vpop.f32.mrb[0].mxu0
        %1054 = vdwg.mxu0
        %v1055 = vpack.c.bf16 %v1050, %v1050
        %v1056 = vld [vmem:[#allocation8 + $0xc] sm:$0xf]
        %v1058 = vsel %vm464, %v1055, 0
        %v1061 = vsel %vm530, %v1056, 0
        %1063 = vmatprep.subr.bf16.mxu0 0
        %1064 = vmatpush1.bf16.msra.mxu0 %v1061
        %1065 = vmatprep.subr.bf16.mxu0 0
        %1066 = vmatpush1.bf16.msra.mxu0 0
        %1067 = vmatprep.subr.bf16.mxu0 0
        %1068 = vmatpush1.bf16.msra.mxu0 0
        %1069 = vmatprep.subr.bf16.mxu0 0
        %1070 = vmatpush1.bf16.msra.mxu0 0
        %1071 = vmatprep.subr.bf16.mxu0 0
        %1072 = vmatpush1.bf16.msra.mxu0 0
        %1073 = vmatprep.subr.bf16.mxu0 0
        %1074 = vmatpush1.bf16.msra.mxu0 0
        %1075 = vmatprep.subr.bf16.mxu0 0
        %1076 = vmatpush1.bf16.msra.mxu0 0
        %1077 = vmatprep.subr.bf16.mxu0 0
        %1078 = vmatpush1.bf16.msra.mxu0 0
        %1079 = vmatprep.subr.bf16.mxu0 0
        %1080 = vmatpush1.bf16.msra.mxu0 0
        %1081 = vmatprep.subr.bf16.mxu0 0
        %1082 = vmatpush1.bf16.msra.mxu0 0
        %1083 = vmatprep.subr.bf16.mxu0 0
        %1084 = vmatpush1.bf16.msra.mxu0 0
        %1085 = vmatprep.subr.bf16.mxu0 0
        %1086 = vmatpush1.bf16.msra.mxu0 0
        %1087 = vmatprep.subr.bf16.mxu0 0
        %1088 = vmatpush1.bf16.msra.mxu0 0
        %1089 = vmatprep.subr.bf16.mxu0 0
        %1090 = vmatpush1.bf16.msra.mxu0 0
        %1091 = vmatprep.subr.bf16.mxu0 0
        %1092 = vmatpush1.bf16.msra.mxu0 0
        %1093 = vmatprep.subr.bf16.mxu0 0
        %1094 = vmatpush1.bf16.msra.mxu0 0
        %1095 = vmatprep.mubr.bf16.mxu0 0
        %1096 = vmatmul.mubr.bf16.gmra.mrb[0].mxu0 %v1058
        %v1097 = vpop.f32.mrb[0].mxu0
        %v1098 = vadd.f32 0.0, %v1097
        %v1099 = vpop.f32.mrb[0].mxu0
        %v1100 = vpop.f32.mrb[0].mxu0
        %v1101 = vpop.f32.mrb[0].mxu0
        %1102 = vdwg.mxu0
        %v1103 = vadd.f32 %v942, %v1098
        %v1104 = vadd.f32 %v388, %v1103
        %v1105 = vld [vmem:[%s5] sm:$0x1]
        %v1107 = vlaneseq
        %v1108 = vshrl.u32 %v1107, 7
        %v1109 = vsub.s32 0, %v1108
        %v1110 = vrot.slane %v1105, %v1109
        %v1112 = vadd.f32 %v1104, %v1110
        %v1113 = vsel %vm413, %v1112, 0.0
        %1114 = vadd.xlane.f32.xlu0 %v1113
        %v1115 = vpop.xlane.xlu0 %1114
        %v1116 = vrcp.pop 32.0
        %v1117 = vmul.f32 %v1115, %v1116
        %v1118 = vsub.f32 %v1112, %v1117
        %v1119 = vmul.f32 %v1118, %v1118
        %v1120 = vsel %vm413, %v1119, 0.0
        %1121 = vadd.xlane.f32.xlu0 %v1120
        %v1122 = vpop.xlane.xlu0 %1121
        %v1123 = vmul.f32 %v1122, %v1116
        %v1124 = vadd.f32 %v1123, 1e-05
        %v1125 = vrsqrt.pop %v1124
        %v1126 = vmul.f32 %v1118, %v1125
        %v1127 = vld [vmem:[%s6] sm:$0x1]
        %v1129 = vlaneseq
        %v1130 = vshrl.u32 %v1129, 7
        %v1131 = vsub.s32 0, %v1130
        %v1132 = vrot.slane %v1127, %v1131
        %v1134 = vmul.f32 %v1126, %v1132
        %v1135 = vld [vmem:[%s7] sm:$0x1]
        %v1137 = vlaneseq
        %v1138 = vshrl.u32 %v1137, 7
        %v1139 = vsub.s32 0, %v1138
        %v1140 = vrot.slane %v1135, %v1139
        %v1142 = vadd.f32 %v1134, %v1140
        %1143 = vst.msk [vmem:[%s386] sm:$0xff] %vm413, %v1142
        %s1144 = sand.u32 %s215, 1
        %s1145 = scalar_lea.sflag [#allocation4], %s1144
        %s1146 = sand.u32 %s215, 1
        %s1147 = smul.addr %s1146, 8
        %s1148 = scalar_lea.vmem [#allocation10], %s1147
        // Predicated region
        $region69: #{tpu_custom_call.1} parent=51 // pred_check
          %p1149 = pneg %p225
        $region70: #{tpu_custom_call.1} parent=51 // pred_check_branch
          %1151 = sbr.rel (%p1149) target = $region72
        $region71: #{tpu_custom_call.1} parent=51 // pred_region
          %s1153 = ssub.s32 128, 128
          %1154 = vsyncadd %s1145, %s1153
          %s1155 = smul.addr %s29, 128
          %s1156 = scalar_lea.hbm %s8, %s1155
          %s1158 = sshll.u32 %s1148, 4
          %s1159 = int_to_ptr.vmem [resolvable:$true] %s1158
          %1161 = dma.vmem_to_hbm [thread:$0]  %s1159, 128, %s1156, %s1145
        $region72: #{tpu_custom_call.1} parent=51 // pred_fallthru
          _
      $region52: #{tpu_custom_call.1} parent=5 // pred_fallthru
        _
      %p1162 = scmp.le.s32.totalorder 2, %s24
      // Predicated region
      $region73: #{tpu_custom_call.1} parent=5 // pred_check
        %p1163 = pneg %p1162
      $region74: #{tpu_custom_call.1} parent=5 // pred_check_branch
        %1165 = sbr.rel (%p1163) target = $region76
      $region75: #{tpu_custom_call.1} parent=5 // pred_region
        %s1166 = ssub.s32 %s24, 2
        // Predicated region
        $region77: #{tpu_custom_call.1} parent=75 // pred_check
          %p1167 = pneg %p231
        $region78: #{tpu_custom_call.1} parent=75 // pred_check_branch
          %1169 = sbr.rel (%p1167) target = $region80
        $region79: #{tpu_custom_call.1} parent=75 // pred_region
          %s1170 = sand.u32 %s216, 1
          %s1171 = scalar_lea.sflag [#allocation4], %s1170
          %s1172 = sand.u32 %s216, 1
          %s1173 = smul.addr %s1172, 8
          %s1174 = scalar_lea.vmem [#allocation10], %s1173
          %1175 = dma.done %s1171, 128
        $region80: #{tpu_custom_call.1} parent=75 // pred_fallthru
          _
      $region76: #{tpu_custom_call.1} parent=5 // pred_fallthru
        _
    $region6: #{tpu_custom_call.1} parent=1 // loop_footer
      %s28 = sadd.s32 1, %s24
    $region7: #{tpu_custom_call.1} parent=1 // loop_footer_branch
      %23 = sbr.rel target = $region3
    $region8: #{tpu_custom_call.1} parent=1 // loop_exit
      _
    %1176 = vsyncpa [#allocation3], 1
    %s1177 = scalar_lea.sflag [#allocation3], 1
    %1178 = vsyncpa %s1177, 1
    %1179 = vsyncpa [#allocation6], 1
    %s1180 = scalar_lea.sflag [#allocation6], 1
    %1181 = vsyncpa %s1180, 1
    %1182 = vsyncpa [#allocation9], 1
    %1183 = vsyncpa [#allocation4], 1
    %s1184 = scalar_lea.sflag [#allocation4], 1
    %1185 = vsyncpa %s1184, 1

</llo_original>
